<compile_context>
chip_gen: v5e
topology: v5e:2x2
jax: 0.10.0
libtpu: 0.0.40
codegen_flags: <defaults>
</compile_context>

<pallas_src>
from functools import partial

import jax
import jax.numpy as jnp
import numpy as np
from jax import lax
from jax.experimental import pallas as pl
from jax.experimental.pallas import tpu as pltpu


def _recip(x):
    # EUP approximate reciprocal + one Newton step on the (small) reduced
    # tensor: keeps the divide off the VPU while staying ~f32-exact.
    r = pl.reciprocal(x, approx=True)
    return r * (2.0 - x * r)


def _linear_attention_kernel(x_ref, wqkv_ref, wout_ref, bout_ref, g_ref, o_ref,
                             *, heads, dim_head, scale, n_valid, matmul_dtype):
    # x_ref:    (1, C, Np)    input features for this batch element (N padded)
    # wqkv_ref: (3*H*D, C)    qkv 1x1-conv weight (no bias)
    # wout_ref: (C, H*D)      output 1x1-conv weight
    # bout_ref: (C, 1)        output 1x1-conv bias
    # g_ref:    (C, 1)        LayerNorm gain
    # o_ref:    (1, C, Np)    output
    D = dim_head
    HD = heads * D
    n_pad = x_ref.shape[-1]
    cdt = matmul_dtype

    x = x_ref[0]                                           # (C, Np)
    wqkv = wqkv_ref[...]                                   # (3HD, C)

    # qkv projection: 1x1 conv == channel matmul (MXU), f32 accumulate.
    qkv = jnp.dot(wqkv.astype(cdt), x.astype(cdt),
                  preferred_element_type=jnp.float32)      # (3HD, Np)

    # Split q / k / v and batch the heads on a leading axis (free reshape:
    # D = 32 is sublane-aligned).
    q = qkv[0 * HD:1 * HD].reshape(heads, D, n_pad)        # (H, D, Np)
    k = qkv[1 * HD:2 * HD].reshape(heads, D, n_pad)
    v = qkv[2 * HD:3 * HD].reshape(heads, D, n_pad)

    # softmax(q) over dim_head (sublane axis), open-coded.
    q_max = jnp.max(q, axis=1, keepdims=True)              # (H, 1, Np)
    q_exp = jnp.exp(q - q_max)
    q_soft = q_exp * _recip(jnp.sum(q_exp, axis=1, keepdims=True))

    # softmax(k) over spatial (lane axis), open-coded; mask the padded tail
    # (only generated when padding was actually added — trace-time branch).
    k_max = jnp.max(k, axis=2, keepdims=True)              # (H, D, 1)
    k_exp = jnp.exp(k - k_max)
    if n_pad != n_valid:
        lane = lax.broadcasted_iota(jnp.int32, (1, 1, n_pad), 2)
        k_exp = k_exp * (lane < n_valid).astype(jnp.float32)
    k_soft = k_exp * _recip(jnp.sum(k_exp, axis=2, keepdims=True))

    # context[h, d, e] = sum_n k_soft[h, d, n] * v[h, e, n]   (head-batched MXU)
    context = lax.dot_general(
        k_soft.astype(cdt), v.astype(cdt),
        dimension_numbers=(((2,), (2,)), ((0,), (0,))),
        preferred_element_type=jnp.float32)                # (H, D, D)
    # Fold softmax(q)*scale and v/(h*w) onto the tiny (D, D) context.
    context = context * (scale / n_valid)

    # out[h, e, n] = sum_d context[h, d, e] * q_soft[h, d, n]
    out = lax.dot_general(
        context.astype(cdt), q_soft.astype(cdt),
        dimension_numbers=(((1,), (1,)), ((0,), (0,))),
        preferred_element_type=jnp.float32)                # (H, D, Np)
    out_cat = out.reshape(HD, n_pad)                       # (HD, Np), free merge

    # output 1x1 conv + bias
    y = jnp.dot(wout_ref[...].astype(cdt), out_cat.astype(cdt),
                preferred_element_type=jnp.float32) + bout_ref[...]   # (C, Np)

    # Channel LayerNorm (unbiased=False, eps=1e-5), one-pass statistics.
    inv_c = 1.0 / y.shape[0]
    mean = jnp.sum(y, axis=0, keepdims=True) * inv_c                  # (1, Np)
    mean_sq = jnp.sum(y * y, axis=0, keepdims=True) * inv_c           # (1, Np)
    var = jnp.maximum(mean_sq - mean * mean, 0.0)
    y = (y - mean) * lax.rsqrt(var + 1e-5) * g_ref[...]               # (C, Np)

    o_ref[0] = y.astype(o_ref.dtype)


def linear_attention(x, w_qkv, w_out, b_out, g, *, heads, dim_head,
                     matmul_dtype=jnp.float32):
    """x: (B, C, H, W) float32 NCHW. Returns (B, C, H, W).

    matmul_dtype=jnp.bfloat16 casts MXU operands (f32 accumulate) — useful on
    v6e/v7x for large feature maps; keep f32 on v5e / for exactness.
    """
    B, C, Hs, Ws = x.shape
    N = Hs * Ws
    HD = heads * dim_head
    scale = dim_head ** (-0.5)

    # Pad the spatial length up to a multiple of 128 so stores are lane-dense.
    N_pad = max(128, ((N + 127) // 128) * 128)
    x2 = x.reshape(B, C, N)
    if N_pad != N:
        x2 = jnp.pad(x2, ((0, 0), (0, 0), (0, N_pad - N)))

    b_out2 = b_out.reshape(C, 1)
    g2 = g.reshape(C, 1)

    kernel = partial(_linear_attention_kernel, heads=heads, dim_head=dim_head,
                     scale=scale, n_valid=N, matmul_dtype=matmul_dtype)

    out = pl.pallas_call(
        kernel,
        out_shape=jax.ShapeDtypeStruct((B, C, N_pad), jnp.float32),
        grid_spec=pltpu.PrefetchScalarGridSpec(
            num_scalar_prefetch=0,
            grid=(B,),
            in_specs=[
                pl.BlockSpec((1, C, N_pad), lambda b: (b, 0, 0)),  # x
                pl.BlockSpec((3 * HD, C), lambda b: (0, 0)),       # w_qkv
                pl.BlockSpec((C, HD), lambda b: (0, 0)),           # w_out
                pl.BlockSpec((C, 1), lambda b: (0, 0)),            # b_out
                pl.BlockSpec((C, 1), lambda b: (0, 0)),            # g
            ],
            out_specs=pl.BlockSpec((1, C, N_pad), lambda b: (b, 0, 0)),
        ),
        compiler_params=pltpu.CompilerParams(
            dimension_semantics=("parallel",)),
    )(x2, w_qkv, w_out, b_out2, g2)

    if N_pad != N:
        out = out[:, :, :N]
    return out.reshape(B, C, Hs, Ws)


def linear_attention_reference(x, w_qkv, w_out, b_out, g, *, heads, dim_head):
    """Pure-JAX reference mirroring the PyTorch forward."""
    B, C, Hs, Ws = x.shape
    N = Hs * Ws
    scale = dim_head ** (-0.5)
    x2 = x.reshape(B, C, N)
    qkv = jnp.einsum('oc,bcn->bon', w_qkv, x2)
    q, k, v = jnp.split(qkv, 3, axis=1)
    q, k, v = (t.reshape(B, heads, dim_head, N) for t in (q, k, v))
    q = jax.nn.softmax(q, axis=-2) * scale
    k = jax.nn.softmax(k, axis=-1)
    v = v / N
    ctx = jnp.einsum('bhdn,bhen->bhde', k, v)
    out = jnp.einsum('bhde,bhdn->bhen', ctx, q)
    out = out.reshape(B, heads * dim_head, N)
    y = jnp.einsum('co,bon->bcn', w_out, out) + b_out.reshape(1, C, 1)
    mean = y.mean(axis=1, keepdims=True)
    var = ((y - mean) ** 2).mean(axis=1, keepdims=True)
    y = (y - mean) * lax.rsqrt(var + 1e-5) * g.reshape(1, C, 1)
    return y.reshape(B, C, Hs, Ws)


if __name__ == "__main__":
    # Module hyperparameters (defaults: heads=4, dim_head=32)
    dim, heads, dim_head = 8, 4, 32
    hidden_dim = heads * dim_head

    key = jax.random.PRNGKey(0)
    kx, kqkv, kout, kb, kx2 = jax.random.split(key, 5)

    # Deterministic synthetic parameters (shapes per nn.Conv2d 1x1 / LayerNorm)
    w_qkv = jax.random.normal(kqkv, (hidden_dim * 3, dim), dtype=jnp.float32) * 0.1
    w_out = jax.random.normal(kout, (dim, hidden_dim), dtype=jnp.float32) * 0.1
    b_out = jax.random.normal(kb, (dim,), dtype=jnp.float32) * 0.1
    g = jnp.ones((1, dim, 1, 1), dtype=jnp.float32)

    # Case 1: lane-aligned spatial size (16x16 -> N = 256)
    x = jax.random.normal(kx, (2, dim, 16, 16), dtype=jnp.float32)
    y = jax.block_until_ready(
        linear_attention(x, w_qkv, w_out, b_out, g, heads=heads, dim_head=dim_head))
    y_ref = linear_attention_reference(x, w_qkv, w_out, b_out, g,
                                       heads=heads, dim_head=dim_head)
    np.testing.assert_allclose(np.asarray(y), np.asarray(y_ref),
                               rtol=1e-3, atol=1e-3)

    # Case 2: non-128-aligned spatial size (10x10 -> N = 100, padded/masked to 128)
    x_u = jax.random.normal(kx2, (2, dim, 10, 10), dtype=jnp.float32)
    y_u = jax.block_until_ready(
        linear_attention(x_u, w_qkv, w_out, b_out, g, heads=heads, dim_head=dim_head))
    y_u_ref = linear_attention_reference(x_u, w_qkv, w_out, b_out, g,
                                         heads=heads, dim_head=dim_head)
    np.testing.assert_allclose(np.asarray(y_u), np.asarray(y_u_ref),
                               rtol=1e-3, atol=1e-3)

    print("KERNEL_OK")
</pallas_src>

<mosaic_0001>
module attributes {stable_mosaic.version = 11 : i64} {
  func.func @_linear_attention_kernel(%arg0: i32, %arg1: memref<1x8x256xf32, #tpu.memory_space<vmem>>, %arg2: memref<384x8xf32, #tpu.memory_space<vmem>>, %arg3: memref<8x128xf32, #tpu.memory_space<vmem>>, %arg4: memref<8x1xf32, #tpu.memory_space<vmem>>, %arg5: memref<8x1xf32, #tpu.memory_space<vmem>>, %arg6: memref<1x8x256xf32, #tpu.memory_space<vmem>>) attributes {dimension_semantics = [#tpu.dimension_semantics<parallel>], iteration_bounds = array<i64: 2>, scalar_prefetch = 0 : i64, scratch_operands = 0 : i64, tpu.core_type = #tpu.core_type<tc>, window_params = [{transform_indices = @transform_0, window_bounds = array<i64: 1, 8, 256>}, {pipeline_mode = #tpu.pipeline_mode<synchronous>, transform_indices = @transform_1, window_bounds = array<i64: 384, 8>}, {pipeline_mode = #tpu.pipeline_mode<synchronous>, transform_indices = @transform_2, window_bounds = array<i64: 8, 128>}, {pipeline_mode = #tpu.pipeline_mode<synchronous>, transform_indices = @transform_3, window_bounds = array<i64: 8, 1>}, {pipeline_mode = #tpu.pipeline_mode<synchronous>, transform_indices = @transform_4, window_bounds = array<i64: 8, 1>}, {transform_indices = @transform_5, window_bounds = array<i64: 1, 8, 256>}]} {
    %c0 = arith.constant 0 : index
    %c0_0 = arith.constant 0 : index
    %c0_1 = arith.constant 0 : index
    %0 = vector.load %arg1[%c0, %c0_0, %c0_1] : memref<1x8x256xf32, #tpu.memory_space<vmem>>, vector<1x8x256xf32>
    %1 = vector.shape_cast %0 : vector<1x8x256xf32> to vector<8x256xf32>
    %c0_2 = arith.constant 0 : index
    %c0_3 = arith.constant 0 : index
    %2 = vector.load %arg2[%c0_2, %c0_3] : memref<384x8xf32, #tpu.memory_space<vmem>>, vector<384x8xf32>
    %cst = arith.constant dense<0.000000e+00> : vector<384x256xf32>
    %3 = tpu.matmul %2, %1, %cst {dimension_numbers = #tpu.dot_dimension_numbers<[1], [0], [0], [1], [0, 0, 1, 1], [], []>} : vector<384x8xf32>, vector<8x256xf32>, vector<384x256xf32> -> vector<384x256xf32>
    %4 = vector.extract_strided_slice %3 {offsets = [0, 0], sizes = [128, 256], strides = [1, 1]} : vector<384x256xf32> to vector<128x256xf32>
    %5 = vector.shape_cast %4 : vector<128x256xf32> to vector<4x32x256xf32>
    %6 = vector.extract_strided_slice %3 {offsets = [128, 0], sizes = [128, 256], strides = [1, 1]} : vector<384x256xf32> to vector<128x256xf32>
    %7 = vector.shape_cast %6 : vector<128x256xf32> to vector<4x32x256xf32>
    %8 = vector.extract_strided_slice %3 {offsets = [256, 0], sizes = [128, 256], strides = [1, 1]} : vector<384x256xf32> to vector<128x256xf32>
    %9 = vector.shape_cast %8 : vector<128x256xf32> to vector<4x32x256xf32>
    %cst_4 = arith.constant dense<0xFF800000> : vector<4x256xf32>
    %10 = vector.multi_reduction <maximumf>, %5, %cst_4 [1] : vector<4x32x256xf32> to vector<4x256xf32>
    %11 = vector.shape_cast %10 : vector<4x256xf32> to vector<4x1x256xf32>
    %12 = vector.broadcast %11 : vector<4x1x256xf32> to vector<4x32x256xf32>
    %13 = arith.subf %5, %12 : vector<4x32x256xf32>
    %14 = math.exp %13 : vector<4x32x256xf32>
    %cst_5 = arith.constant dense<0.000000e+00> : vector<4x256xf32>
    %15 = vector.multi_reduction <add>, %14, %cst_5 [1] : vector<4x32x256xf32> to vector<4x256xf32>
    %16 = vector.shape_cast %15 : vector<4x256xf32> to vector<4x1x256xf32>
    %17 = tpu.reciprocal %16 {approx = true} : vector<4x1x256xf32> -> vector<4x1x256xf32>
    %18 = arith.mulf %16, %17 : vector<4x1x256xf32>
    %cst_6 = arith.constant 2.000000e+00 : f32
    %19 = vector.broadcast %cst_6 : f32 to vector<4x1x256xf32>
    %20 = arith.subf %19, %18 : vector<4x1x256xf32>
    %21 = arith.mulf %17, %20 : vector<4x1x256xf32>
    %22 = vector.broadcast %21 : vector<4x1x256xf32> to vector<4x32x256xf32>
    %23 = arith.mulf %14, %22 : vector<4x32x256xf32>
    %cst_7 = arith.constant dense<0xFF800000> : vector<4x32xf32>
    %24 = vector.multi_reduction <maximumf>, %7, %cst_7 [2] : vector<4x32x256xf32> to vector<4x32xf32>
    %25 = vector.shape_cast %24 : vector<4x32xf32> to vector<4x32x1xf32>
    %26 = vector.broadcast %25 : vector<4x32x1xf32> to vector<4x32x256xf32>
    %27 = arith.subf %7, %26 : vector<4x32x256xf32>
    %28 = math.exp %27 : vector<4x32x256xf32>
    %cst_8 = arith.constant dense<0.000000e+00> : vector<4x32xf32>
    %29 = vector.multi_reduction <add>, %28, %cst_8 [2] : vector<4x32x256xf32> to vector<4x32xf32>
    %30 = vector.shape_cast %29 : vector<4x32xf32> to vector<4x32x1xf32>
    %31 = tpu.reciprocal %30 {approx = true} : vector<4x32x1xf32> -> vector<4x32x1xf32>
    %32 = arith.mulf %30, %31 : vector<4x32x1xf32>
    %cst_9 = arith.constant 2.000000e+00 : f32
    %33 = vector.broadcast %cst_9 : f32 to vector<4x32x1xf32>
    %34 = arith.subf %33, %32 : vector<4x32x1xf32>
    %35 = arith.mulf %31, %34 : vector<4x32x1xf32>
    %36 = vector.broadcast %35 : vector<4x32x1xf32> to vector<4x32x256xf32>
    %37 = arith.mulf %28, %36 : vector<4x32x256xf32>
    %cst_10 = arith.constant dense<0.000000e+00> : vector<4x32x32xf32>
    %38 = tpu.matmul %37, %9, %cst_10 {dimension_numbers = #tpu.dot_dimension_numbers<[2], [2], [1], [1], [0, 0, 0, 1, 1, 1], [0], [0]>} : vector<4x32x256xf32>, vector<4x32x256xf32>, vector<4x32x32xf32> -> vector<4x32x32xf32>
    %cst_11 = arith.constant 6.90533954E-4 : f32
    %39 = vector.broadcast %cst_11 : f32 to vector<4x32x32xf32>
    %40 = arith.mulf %38, %39 : vector<4x32x32xf32>
    %cst_12 = arith.constant dense<0.000000e+00> : vector<4x32x256xf32>
    %41 = tpu.matmul %40, %23, %cst_12 {dimension_numbers = #tpu.dot_dimension_numbers<[1], [1], [2], [2], [0, 0, 0, 2, 1, 2], [0], [0]>} : vector<4x32x32xf32>, vector<4x32x256xf32>, vector<4x32x256xf32> -> vector<4x32x256xf32>
    %42 = vector.shape_cast %41 : vector<4x32x256xf32> to vector<128x256xf32>
    %c0_13 = arith.constant 0 : index
    %c0_14 = arith.constant 0 : index
    %43 = vector.load %arg3[%c0_13, %c0_14] : memref<8x128xf32, #tpu.memory_space<vmem>>, vector<8x128xf32>
    %cst_15 = arith.constant dense<0.000000e+00> : vector<8x256xf32>
    %44 = tpu.matmul %43, %42, %cst_15 {dimension_numbers = #tpu.dot_dimension_numbers<[1], [0], [0], [1], [0, 0, 1, 1], [], []>} : vector<8x128xf32>, vector<128x256xf32>, vector<8x256xf32> -> vector<8x256xf32>
    %c0_16 = arith.constant 0 : index
    %c0_17 = arith.constant 0 : index
    %45 = vector.load %arg4[%c0_16, %c0_17] : memref<8x1xf32, #tpu.memory_space<vmem>>, vector<8x1xf32>
    %46 = vector.broadcast %45 : vector<8x1xf32> to vector<8x256xf32>
    %47 = arith.addf %44, %46 : vector<8x256xf32>
    %cst_18 = arith.constant dense<0.000000e+00> : vector<256xf32>
    %48 = vector.multi_reduction <add>, %47, %cst_18 [0] : vector<8x256xf32> to vector<256xf32>
    %49 = vector.shape_cast %48 : vector<256xf32> to vector<1x256xf32>
    %cst_19 = arith.constant 1.250000e-01 : f32
    %50 = vector.broadcast %cst_19 : f32 to vector<1x256xf32>
    %51 = arith.mulf %49, %50 : vector<1x256xf32>
    %52 = arith.mulf %47, %47 : vector<8x256xf32>
    %cst_20 = arith.constant dense<0.000000e+00> : vector<256xf32>
    %53 = vector.multi_reduction <add>, %52, %cst_20 [0] : vector<8x256xf32> to vector<256xf32>
    %54 = vector.shape_cast %53 : vector<256xf32> to vector<1x256xf32>
    %cst_21 = arith.constant 1.250000e-01 : f32
    %55 = vector.broadcast %cst_21 : f32 to vector<1x256xf32>
    %56 = arith.mulf %54, %55 : vector<1x256xf32>
    %57 = arith.mulf %51, %51 : vector<1x256xf32>
    %58 = arith.subf %56, %57 : vector<1x256xf32>
    %cst_22 = arith.constant 0.000000e+00 : f32
    %59 = vector.broadcast %cst_22 : f32 to vector<1x256xf32>
    %60 = arith.maximumf %58, %59 : vector<1x256xf32>
    %61 = vector.broadcast %51 : vector<1x256xf32> to vector<8x256xf32>
    %62 = arith.subf %47, %61 : vector<8x256xf32>
    %cst_23 = arith.constant 9.99999974E-6 : f32
    %63 = vector.broadcast %cst_23 : f32 to vector<1x256xf32>
    %64 = arith.addf %60, %63 : vector<1x256xf32>
    %65 = math.rsqrt %64 : vector<1x256xf32>
    %66 = vector.broadcast %65 : vector<1x256xf32> to vector<8x256xf32>
    %67 = arith.mulf %62, %66 : vector<8x256xf32>
    %c0_24 = arith.constant 0 : index
    %c0_25 = arith.constant 0 : index
    %68 = vector.load %arg5[%c0_24, %c0_25] : memref<8x1xf32, #tpu.memory_space<vmem>>, vector<8x1xf32>
    %69 = vector.broadcast %68 : vector<8x1xf32> to vector<8x256xf32>
    %70 = arith.mulf %67, %69 : vector<8x256xf32>
    %c0_26 = arith.constant 0 : index
    %c0_27 = arith.constant 0 : index
    %c0_28 = arith.constant 0 : index
    %71 = vector.load %arg6[%c0_26, %c0_27, %c0_28] : memref<1x8x256xf32, #tpu.memory_space<vmem>>, vector<1x8x256xf32>
    %72 = vector.shape_cast %71 : vector<1x8x256xf32> to vector<8x256xf32>
    %73 = vector.shape_cast %70 : vector<8x256xf32> to vector<1x8x256xf32>
    tpu.vector_store %arg6[%c0_26, %c0_27, %c0_28], %73 {strides = array<i32>} : memref<1x8x256xf32, #tpu.memory_space<vmem>>, vector<1x8x256xf32>,
    return
  }
  func.func @transform_0(%arg0: i32) -> (i32, i32, i32) {
    %c0_i32 = arith.constant 0 : i32
    %c0_i32_0 = arith.constant 0 : i32
    %c0_i32_1 = arith.constant 0 : i32
    return %arg0, %c0_i32, %c0_i32_0 : i32, i32, i32
  }
  func.func @transform_1(%arg0: i32) -> (i32, i32) {
    %c0_i32 = arith.constant 0 : i32
    %c0_i32_0 = arith.constant 0 : i32
    %c0_i32_1 = arith.constant 0 : i32
    return %c0_i32, %c0_i32_0 : i32, i32
  }
  func.func @transform_2(%arg0: i32) -> (i32, i32) {
    %c0_i32 = arith.constant 0 : i32
    %c0_i32_0 = arith.constant 0 : i32
    %c0_i32_1 = arith.constant 0 : i32
    return %c0_i32, %c0_i32_0 : i32, i32
  }
  func.func @transform_3(%arg0: i32) -> (i32, i32) {
    %c0_i32 = arith.constant 0 : i32
    %c0_i32_0 = arith.constant 0 : i32
    %c0_i32_1 = arith.constant 0 : i32
    return %c0_i32, %c0_i32_0 : i32, i32
  }
  func.func @transform_4(%arg0: i32) -> (i32, i32) {
    %c0_i32 = arith.constant 0 : i32
    %c0_i32_0 = arith.constant 0 : i32
    %c0_i32_1 = arith.constant 0 : i32
    return %c0_i32, %c0_i32_0 : i32, i32
  }
  func.func @transform_5(%arg0: i32) -> (i32, i32, i32) {
    %c0_i32 = arith.constant 0 : i32
    %c0_i32_0 = arith.constant 0 : i32
    %c0_i32_1 = arith.constant 0 : i32
    return %arg0, %c0_i32, %c0_i32_0 : i32, i32, i32
  }
}

</mosaic_0001>

<llo_original>
// kernel: tpu_custom_call.1
$region0: #{tpu_custom_call.1}
  #allocation0 [shape = 'u32[]', space=smem, size = 0x4, offset = 0x4, fixed_abs, tag = 'smem constant byte address 0x4 - core index']
  #allocation1 [shape = 'u32[72,128]{1,0:T(1,128)}', space=vmem, size = 0x9000, scoped, tag = 'internal scratch']
  %s0 = inlined_call_operand.vmem [shape: f32[2,8,256], index: 0, kind: input, shape index: {}]
  %s1 = inlined_call_operand.vmem [shape: f32[384,8], index: 1, kind: input, shape index: {}]
  %s2 = inlined_call_operand.vmem [shape: f32[8,128], index: 2, kind: input, shape index: {}]
  %s3 = inlined_call_operand.vmem [shape: f32[8,1], index: 3, kind: input, shape index: {}]
  %s4 = inlined_call_operand.vmem [shape: f32[8,1], index: 4, kind: input, shape index: {}]
  %s5 = inlined_call_operand.hbm [shape: f32[2,8,256], index: 5, kind: output, shape index: {}]
  %s6 = sld [smem:[#allocation0]]
  $region53: #{tpu_custom_call.1} parent=0
    _
  %s8 = ssub.s32 1, %s6
  %s9 = scalar_select 0, %s8, %s6
  $region1: #{tpu_custom_call.1} parent=0
    #allocation2 [shape = 'u8[16384]{0}', space=vmem, size = 0x4000, scoped, tag = 'output window, operand 0']
    #allocation3 [shape = 's32[2]{0}', space=sflag, size = 0x8, scoped, tag = 'scoped memory for tpu_custom_call.1']
    %10 = vsyncpa [#allocation3], 0
    %s11 = scalar_lea.sflag [#allocation3], 1
    %12 = vsyncpa %s11, 0
    loop: start=0, step=1, limit=4
    $region2: #{tpu_custom_call.1} parent=1 // loop_pre_header
      _
    $region3: #{tpu_custom_call.1} parent=1 // loop_header
      %s14 = sphi 0, %s18
      %p15 = scmp.ge.s32.totalorder %s14, 4
      %s24 = sphi 0, %s26
      %s27 = sphi 0, %s24
      %s28 = sphi 0, %s27
      %s44 = sphi 0, %s28
      %s48 = sphi 0, %s48
      %s50 = sphi 0, %s48
      %s51 = sphi 0, %s50
      %s65 = sphi 0, %s51
      %s69 = sphi 0, %s69
      %s71 = sphi 0, %s69
      %s72 = sphi 0, %s71
      %s86 = sphi 0, %s72
      %s90 = sphi 0, %s90
      %s92 = sphi 0, %s90
      %s93 = sphi 0, %s92
      %s107 = sphi 0, %s93
      %s111 = sphi 0, %s111
      %s113 = sphi 0, %s111
      %s114 = sphi 0, %s113
      %s128 = sphi 0, %s114
      %s134 = sphi 0, %s136
      %s137 = sphi 0, %s134
      %s138 = sphi 0, %s137
      %s154 = sphi 0, %s138
    $region4: #{tpu_custom_call.1} parent=1 // loop_header_branch
      %17 = sbr.rel (%p15) target = $region8
    $region5: #{tpu_custom_call.1} parent=1 // loop_body
      %s19 = ssub.s32 %s14, 1
      %s20 = ssub.s32 %s14, 2
      %s21 = sadd.s32 %s14, 1
      %s22 = ssub.s32 %s14, %s21
      %p23 = scmp.eq.s32.totalorder %s22, 0
      %s25 = sadd.s32 %s24, 1
      %s26 = scalar_select %p23, %s24, %s25
      %p29 = pneg %p23
      %p30 = scmp.eq.s32.totalorder %s14, 1
      %p31 = por %p29, %p30
      %p32 = scmp.ne.s32.totalorder %s24, %s27
      %p33 = scmp.eq.s32.totalorder %s14, 0
      %p34 = por %p32, %p33
      %p35 = scmp.ne.s32.totalorder %s24, %s27
      %p36 = scmp.eq.s32.totalorder %s19, 1
      %p37 = por %p35, %p36
      %p38 = scmp.ne.s32.totalorder %s27, %s28
      %p39 = scmp.eq.s32.totalorder %s19, 0
      %p40 = por %p38, %p39
      %p41 = scmp.ne.s32.totalorder %s27, %s28
      %p42 = scmp.eq.s32.totalorder %s20, 1
      %p43 = por %p41, %p42
      %p45 = scmp.ne.s32.totalorder %s28, %s44
      %p46 = scmp.eq.s32.totalorder %s20, 0
      %p47 = por %p45, %p46
      %s49 = sadd.s32 %s48, 1
      %p52 = scmp.eq.s32.totalorder %s14, 1
      %p53 = scmp.ne.s32.totalorder %s48, %s50
      %p54 = scmp.eq.s32.totalorder %s14, 0
      %p55 = por %p53, %p54
      %p56 = scmp.ne.s32.totalorder %s48, %s50
      %p57 = scmp.eq.s32.totalorder %s19, 1
      %p58 = por %p56, %p57
      %p59 = scmp.ne.s32.totalorder %s50, %s51
      %p60 = scmp.eq.s32.totalorder %s19, 0
      %p61 = por %p59, %p60
      %p62 = scmp.ne.s32.totalorder %s50, %s51
      %p63 = scmp.eq.s32.totalorder %s20, 1
      %p64 = por %p62, %p63
      %p66 = scmp.ne.s32.totalorder %s51, %s65
      %p67 = scmp.eq.s32.totalorder %s20, 0
      %p68 = por %p66, %p67
      %s70 = sadd.s32 %s69, 1
      %p73 = scmp.eq.s32.totalorder %s14, 1
      %p74 = scmp.ne.s32.totalorder %s69, %s71
      %p75 = scmp.eq.s32.totalorder %s14, 0
      %p76 = por %p74, %p75
      %p77 = scmp.ne.s32.totalorder %s69, %s71
      %p78 = scmp.eq.s32.totalorder %s19, 1
      %p79 = por %p77, %p78
      %p80 = scmp.ne.s32.totalorder %s71, %s72
      %p81 = scmp.eq.s32.totalorder %s19, 0
      %p82 = por %p80, %p81
      %p83 = scmp.ne.s32.totalorder %s71, %s72
      %p84 = scmp.eq.s32.totalorder %s20, 1
      %p85 = por %p83, %p84
      %p87 = scmp.ne.s32.totalorder %s72, %s86
      %p88 = scmp.eq.s32.totalorder %s20, 0
      %p89 = por %p87, %p88
      %s91 = sadd.s32 %s90, 1
      %p94 = scmp.eq.s32.totalorder %s14, 1
      %p95 = scmp.ne.s32.totalorder %s90, %s92
      %p96 = scmp.eq.s32.totalorder %s14, 0
      %p97 = por %p95, %p96
      %p98 = scmp.ne.s32.totalorder %s90, %s92
      %p99 = scmp.eq.s32.totalorder %s19, 1
      %p100 = por %p98, %p99
      %p101 = scmp.ne.s32.totalorder %s92, %s93
      %p102 = scmp.eq.s32.totalorder %s19, 0
      %p103 = por %p101, %p102
      %p104 = scmp.ne.s32.totalorder %s92, %s93
      %p105 = scmp.eq.s32.totalorder %s20, 1
      %p106 = por %p104, %p105
      %p108 = scmp.ne.s32.totalorder %s93, %s107
      %p109 = scmp.eq.s32.totalorder %s20, 0
      %p110 = por %p108, %p109
      %s112 = sadd.s32 %s111, 1
      %p115 = scmp.eq.s32.totalorder %s14, 1
      %p116 = scmp.ne.s32.totalorder %s111, %s113
      %p117 = scmp.eq.s32.totalorder %s14, 0
      %p118 = por %p116, %p117
      %p119 = scmp.ne.s32.totalorder %s111, %s113
      %p120 = scmp.eq.s32.totalorder %s19, 1
      %p121 = por %p119, %p120
      %p122 = scmp.ne.s32.totalorder %s113, %s114
      %p123 = scmp.eq.s32.totalorder %s19, 0
      %p124 = por %p122, %p123
      %p125 = scmp.ne.s32.totalorder %s113, %s114
      %p126 = scmp.eq.s32.totalorder %s20, 1
      %p127 = por %p125, %p126
      %p129 = scmp.ne.s32.totalorder %s114, %s128
      %p130 = scmp.eq.s32.totalorder %s20, 0
      %p131 = por %p129, %p130
      %s132 = ssub.s32 %s14, %s21
      %p133 = scmp.eq.s32.totalorder %s132, 0
      %s135 = sadd.s32 %s134, 1
      %s136 = scalar_select %p133, %s134, %s135
      %p139 = pneg %p133
      %p140 = scmp.eq.s32.totalorder %s14, 1
      %p141 = por %p139, %p140
      %p142 = scmp.ne.s32.totalorder %s134, %s137
      %p143 = scmp.eq.s32.totalorder %s14, 0
      %p144 = por %p142, %p143
      %p145 = scmp.ne.s32.totalorder %s134, %s137
      %p146 = scmp.eq.s32.totalorder %s19, 1
      %p147 = por %p145, %p146
      %p148 = scmp.ne.s32.totalorder %s137, %s138
      %p149 = scmp.eq.s32.totalorder %s19, 0
      %p150 = por %p148, %p149
      %p151 = scmp.ne.s32.totalorder %s137, %s138
      %p152 = scmp.eq.s32.totalorder %s20, 1
      %p153 = por %p151, %p152
      %p155 = scmp.ne.s32.totalorder %s138, %s154
      %p156 = scmp.eq.s32.totalorder %s20, 0
      %p157 = por %p155, %p156
      %p158 = scmp.le.s32.totalorder 1, %s14
      %p159 = scmp.lt.s32.totalorder %s14, 3
      %p160 = pnand %p158, %p159
      %p161 = pneg %p160
      // Predicated region
      $region9: #{tpu_custom_call.1} parent=5 // pred_check
        _
      $region10: #{tpu_custom_call.1} parent=5 // pred_check_branch
        %163 = sbr.rel (%p160) target = $region12
      $region11: #{tpu_custom_call.1} parent=5 // pred_region
        %s164 = ssub.s32 %s14, 1
        // Predicated region
        $region13: #{tpu_custom_call.1} parent=11 // pred_check
          %p165 = pneg %p61
        $region14: #{tpu_custom_call.1} parent=11 // pred_check_branch
          %167 = sbr.rel (%p165) target = $region16
        $region15: #{tpu_custom_call.1} parent=11 // pred_region
          _
        $region16: #{tpu_custom_call.1} parent=11 // pred_fallthru
          _
        // Predicated region
        $region17: #{tpu_custom_call.1} parent=11 // pred_check
          %p168 = pneg %p82
        $region18: #{tpu_custom_call.1} parent=11 // pred_check_branch
          %170 = sbr.rel (%p168) target = $region20
        $region19: #{tpu_custom_call.1} parent=11 // pred_region
          _
        $region20: #{tpu_custom_call.1} parent=11 // pred_fallthru
          _
        // Predicated region
        $region21: #{tpu_custom_call.1} parent=11 // pred_check
          %p171 = pneg %p103
        $region22: #{tpu_custom_call.1} parent=11 // pred_check_branch
          %173 = sbr.rel (%p171) target = $region24
        $region23: #{tpu_custom_call.1} parent=11 // pred_region
          _
        $region24: #{tpu_custom_call.1} parent=11 // pred_fallthru
          _
        // Predicated region
        $region25: #{tpu_custom_call.1} parent=11 // pred_check
          %p174 = pneg %p124
        $region26: #{tpu_custom_call.1} parent=11 // pred_check_branch
          %176 = sbr.rel (%p174) target = $region28
        $region27: #{tpu_custom_call.1} parent=11 // pred_region
          _
        $region28: #{tpu_custom_call.1} parent=11 // pred_fallthru
          _
      $region12: #{tpu_custom_call.1} parent=5 // pred_fallthru
        _
      %p177 = scmp.lt.s32.totalorder %s14, 2
      // Predicated region
      $region29: #{tpu_custom_call.1} parent=5 // pred_check
        %p178 = pneg %p177
      $region30: #{tpu_custom_call.1} parent=5 // pred_check_branch
        %180 = sbr.rel (%p178) target = $region32
      $region31: #{tpu_custom_call.1} parent=5 // pred_region
        // Predicated region
        $region33: #{tpu_custom_call.1} parent=31 // pred_check
          %p181 = pneg %p34
        $region34: #{tpu_custom_call.1} parent=31 // pred_check_branch
          %183 = sbr.rel (%p181) target = $region36
        $region35: #{tpu_custom_call.1} parent=31 // pred_region
          %p184 = scmp.lt.s32.totalorder %s14, 1
          %s185 = scalar_select %p184, %s14, 1
          %s186 = smul.addr %s185, 2
          %s187 = smul.addr %s186, 8
          %s188 = scalar_lea.vmem %s0, %s187
        $region36: #{tpu_custom_call.1} parent=31 // pred_fallthru
          _
      $region32: #{tpu_custom_call.1} parent=5 // pred_fallthru
        _
      %p189 = scmp.le.s32.totalorder 1, %s14
      %p190 = scmp.lt.s32.totalorder %s14, 3
      %p191 = pnand %p189, %p190
      %p192 = pneg %p191
      // Predicated region
      $region37: #{tpu_custom_call.1} parent=5 // pred_check
        _
      $region38: #{tpu_custom_call.1} parent=5 // pred_check_branch
        %194 = sbr.rel (%p191) target = $region40
      $region39: #{tpu_custom_call.1} parent=5 // pred_region
        %s195 = ssub.s32 %s14, 1
        %p196 = scmp.lt.s32.totalorder %s19, 1
        %s197 = scalar_select %p196, %s19, 1
        %s198 = smul.addr %s197, 2
        %s199 = smul.addr %s198, 8
        %s200 = scalar_lea.vmem %s0, %s199
        %p201 = pneg %p40
        %p202 = pneg %p37
        %p203 = pneg %p61
        %p204 = pneg %p58
        %p205 = pneg %p82
        %p206 = pneg %p79
        %p207 = pneg %p103
        %p208 = pneg %p100
        %p209 = pneg %p124
        %p210 = pneg %p121
        %p211 = pneg %p150
        %p212 = pneg %p147
        %s213 = sand.u32 %s137, 1
        %s214 = scalar_lea.sflag [#allocation3], %s213
        %s215 = sand.u32 %s137, 1
        %s216 = smul.addr %s215, 16
        %s217 = scalar_lea.vmem [#allocation2], %s216
        %p218 = scmp.lt.s32.totalorder %s19, 1
        %s219 = scalar_select %p218, %s19, 1
        %s220 = smul.addr %s219, 2
        %s221 = smul.addr %s220, 8
        %s222 = scalar_lea.vmem %s0, %s221
        %v223 = vld [vmem:[%s222] sm:$0xff]
        %v224 = vld [vmem:[%s222 + $0x8] sm:$0xff]
        %v225 = vld [vmem:[%s1] sm:$0xff]
        %v226 = vld [vmem:[%s1 + $0x8] sm:$0xff]
        %v227 = vld [vmem:[%s1 + $0x10] sm:$0xff]
        %v228 = vld [vmem:[%s1 + $0x18] sm:$0xff]
        %v229 = vld [vmem:[%s1 + $0x20] sm:$0xff]
        %v230 = vld [vmem:[%s1 + $0x28] sm:$0xff]
        %v231 = vld [vmem:[%s1 + $0x30] sm:$0xff]
        %v232 = vld [vmem:[%s1 + $0x38] sm:$0xff]
        %v233 = vld [vmem:[%s1 + $0x40] sm:$0xff]
        %v234 = vld [vmem:[%s1 + $0x48] sm:$0xff]
        %v235 = vld [vmem:[%s1 + $0x50] sm:$0xff]
        %v236 = vld [vmem:[%s1 + $0x58] sm:$0xff]
        %v237 = vld [vmem:[%s1 + $0x60] sm:$0xff]
        %v238 = vld [vmem:[%s1 + $0x68] sm:$0xff]
        %v239 = vld [vmem:[%s1 + $0x70] sm:$0xff]
        %v240 = vld [vmem:[%s1 + $0x78] sm:$0xff]
        %v241 = vld [vmem:[%s1 + $0x80] sm:$0xff]
        %v242 = vld [vmem:[%s1 + $0x88] sm:$0xff]
        %v243 = vld [vmem:[%s1 + $0x90] sm:$0xff]
        %v244 = vld [vmem:[%s1 + $0x98] sm:$0xff]
        %v245 = vld [vmem:[%s1 + $0xa0] sm:$0xff]
        %v246 = vld [vmem:[%s1 + $0xa8] sm:$0xff]
        %v247 = vld [vmem:[%s1 + $0xb0] sm:$0xff]
        %v248 = vld [vmem:[%s1 + $0xb8] sm:$0xff]
        %v249 = vld [vmem:[%s1 + $0xc0] sm:$0xff]
        %v250 = vld [vmem:[%s1 + $0xc8] sm:$0xff]
        %v251 = vld [vmem:[%s1 + $0xd0] sm:$0xff]
        %v252 = vld [vmem:[%s1 + $0xd8] sm:$0xff]
        %v253 = vld [vmem:[%s1 + $0xe0] sm:$0xff]
        %v254 = vld [vmem:[%s1 + $0xe8] sm:$0xff]
        %v255 = vld [vmem:[%s1 + $0xf0] sm:$0xff]
        %v256 = vld [vmem:[%s1 + $0xf8] sm:$0xff]
        %v257 = vld [vmem:[%s1 + $0x100] sm:$0xff]
        %v258 = vld [vmem:[%s1 + $0x108] sm:$0xff]
        %v259 = vld [vmem:[%s1 + $0x110] sm:$0xff]
        %v260 = vld [vmem:[%s1 + $0x118] sm:$0xff]
        %v261 = vld [vmem:[%s1 + $0x120] sm:$0xff]
        %v262 = vld [vmem:[%s1 + $0x128] sm:$0xff]
        %v263 = vld [vmem:[%s1 + $0x130] sm:$0xff]
        %v264 = vld [vmem:[%s1 + $0x138] sm:$0xff]
        %v265 = vld [vmem:[%s1 + $0x140] sm:$0xff]
        %v266 = vld [vmem:[%s1 + $0x148] sm:$0xff]
        %v267 = vld [vmem:[%s1 + $0x150] sm:$0xff]
        %v268 = vld [vmem:[%s1 + $0x158] sm:$0xff]
        %v269 = vld [vmem:[%s1 + $0x160] sm:$0xff]
        %v270 = vld [vmem:[%s1 + $0x168] sm:$0xff]
        %v271 = vld [vmem:[%s1 + $0x170] sm:$0xff]
        %v272 = vld [vmem:[%s1 + $0x178] sm:$0xff]
        %vm273 = vcmask 64512
        %v275 = vsel %vm273, %v225, 0
        %v278 = vsel %vm273, %v226, 0
        %v281 = vsel %vm273, %v227, 0
        %v284 = vsel %vm273, %v228, 0
        %v287 = vsel %vm273, %v229, 0
        %v290 = vsel %vm273, %v230, 0
        %v293 = vsel %vm273, %v231, 0
        %v296 = vsel %vm273, %v232, 0
        %v299 = vsel %vm273, %v233, 0
        %v302 = vsel %vm273, %v234, 0
        %v305 = vsel %vm273, %v235, 0
        %v308 = vsel %vm273, %v236, 0
        %v311 = vsel %vm273, %v237, 0
        %v314 = vsel %vm273, %v238, 0
        %v317 = vsel %vm273, %v239, 0
        %v320 = vsel %vm273, %v240, 0
        %v323 = vsel %vm273, %v241, 0
        %v326 = vsel %vm273, %v242, 0
        %v329 = vsel %vm273, %v243, 0
        %v332 = vsel %vm273, %v244, 0
        %v335 = vsel %vm273, %v245, 0
        %v338 = vsel %vm273, %v246, 0
        %v341 = vsel %vm273, %v247, 0
        %v344 = vsel %vm273, %v248, 0
        %v347 = vsel %vm273, %v249, 0
        %v350 = vsel %vm273, %v250, 0
        %v353 = vsel %vm273, %v251, 0
        %v356 = vsel %vm273, %v252, 0
        %v359 = vsel %vm273, %v253, 0
        %v362 = vsel %vm273, %v254, 0
        %v365 = vsel %vm273, %v255, 0
        %v368 = vsel %vm273, %v256, 0
        %v371 = vsel %vm273, %v257, 0
        %v374 = vsel %vm273, %v258, 0
        %v377 = vsel %vm273, %v259, 0
        %v380 = vsel %vm273, %v260, 0
        %v383 = vsel %vm273, %v261, 0
        %v386 = vsel %vm273, %v262, 0
        %v389 = vsel %vm273, %v263, 0
        %v392 = vsel %vm273, %v264, 0
        %v395 = vsel %vm273, %v265, 0
        %v398 = vsel %vm273, %v266, 0
        %v401 = vsel %vm273, %v267, 0
        %v404 = vsel %vm273, %v268, 0
        %v407 = vsel %vm273, %v269, 0
        %v410 = vsel %vm273, %v270, 0
        %v413 = vsel %vm273, %v271, 0
        %v416 = vsel %vm273, %v272, 0
        %418 = vmatpush.msra.mxu0 0.0
        %419 = vmatpush.msra.mxu0 0.0
        %420 = vmatpush.msra.mxu0 0.0
        %421 = vmatpush.msra.mxu0 0.0
        %422 = vmatpush.msra.mxu0 0.0
        %423 = vmatpush.msra.mxu0 0.0
        %424 = vmatpush.msra.mxu0 0.0
        %425 = vmatpush.msra.mxu0 0.0
        %426 = vmatpush.msra.mxu0 0.0
        %427 = vmatpush.msra.mxu0 0.0
        %428 = vmatpush.msra.mxu0 0.0
        %429 = vmatpush.msra.mxu0 0.0
        %430 = vmatpush.msra.mxu0 0.0
        %431 = vmatpush.msra.mxu0 0.0
        %432 = vmatpush.msra.mxu0 0.0
        %433 = vmatpush.msra.mxu0 %v223
        %434 = vmatmul.f32.gmra.mxu0 %v275
        %v435 = vpop.f32.mrf.mxu0
        %v436 = vadd.f32 0.0, %v435
        %437 = vmatmul.f32.gmra.mxu0 %v278
        %v438 = vpop.f32.mrf.mxu0
        %v439 = vadd.f32 0.0, %v438
        %440 = vmatmul.f32.gmra.mxu0 %v281
        %v441 = vpop.f32.mrf.mxu0
        %v442 = vadd.f32 0.0, %v441
        %443 = vmatmul.f32.gmra.mxu0 %v284
        %v444 = vpop.f32.mrf.mxu0
        %v445 = vadd.f32 0.0, %v444
        %446 = vmatmul.f32.gmra.mxu0 %v287
        %v447 = vpop.f32.mrf.mxu0
        %v448 = vadd.f32 0.0, %v447
        %449 = vmatmul.f32.gmra.mxu0 %v290
        %v450 = vpop.f32.mrf.mxu0
        %v451 = vadd.f32 0.0, %v450
        %452 = vmatmul.f32.gmra.mxu0 %v293
        %v453 = vpop.f32.mrf.mxu0
        %v454 = vadd.f32 0.0, %v453
        %455 = vmatmul.f32.gmra.mxu0 %v296
        %v456 = vpop.f32.mrf.mxu0
        %v457 = vadd.f32 0.0, %v456
        %458 = vmatmul.f32.gmra.mxu0 %v299
        %v459 = vpop.f32.mrf.mxu0
        %v460 = vadd.f32 0.0, %v459
        %461 = vmatmul.f32.gmra.mxu0 %v302
        %v462 = vpop.f32.mrf.mxu0
        %v463 = vadd.f32 0.0, %v462
        %464 = vmatmul.f32.gmra.mxu0 %v305
        %v465 = vpop.f32.mrf.mxu0
        %v466 = vadd.f32 0.0, %v465
        %467 = vmatmul.f32.gmra.mxu0 %v308
        %v468 = vpop.f32.mrf.mxu0
        %v469 = vadd.f32 0.0, %v468
        %470 = vmatmul.f32.gmra.mxu0 %v311
        %v471 = vpop.f32.mrf.mxu0
        %v472 = vadd.f32 0.0, %v471
        %473 = vmatmul.f32.gmra.mxu0 %v314
        %v474 = vpop.f32.mrf.mxu0
        %v475 = vadd.f32 0.0, %v474
        %476 = vmatmul.f32.gmra.mxu0 %v317
        %v477 = vpop.f32.mrf.mxu0
        %v478 = vadd.f32 0.0, %v477
        %479 = vmatmul.f32.gmra.mxu0 %v320
        %v480 = vpop.f32.mrf.mxu0
        %v481 = vadd.f32 0.0, %v480
        %482 = vmatmul.f32.gmra.mxu0 %v323
        %v483 = vpop.f32.mrf.mxu0
        %v484 = vadd.f32 0.0, %v483
        %485 = vmatmul.f32.gmra.mxu0 %v326
        %v486 = vpop.f32.mrf.mxu0
        %v487 = vadd.f32 0.0, %v486
        %488 = vmatmul.f32.gmra.mxu0 %v329
        %v489 = vpop.f32.mrf.mxu0
        %v490 = vadd.f32 0.0, %v489
        %491 = vmatmul.f32.gmra.mxu0 %v332
        %v492 = vpop.f32.mrf.mxu0
        %v493 = vadd.f32 0.0, %v492
        %494 = vmatmul.f32.gmra.mxu0 %v335
        %v495 = vpop.f32.mrf.mxu0
        %v496 = vadd.f32 0.0, %v495
        %497 = vmatmul.f32.gmra.mxu0 %v338
        %v498 = vpop.f32.mrf.mxu0
        %v499 = vadd.f32 0.0, %v498
        %500 = vmatmul.f32.gmra.mxu0 %v341
        %v501 = vpop.f32.mrf.mxu0
        %v502 = vadd.f32 0.0, %v501
        %503 = vmatmul.f32.gmra.mxu0 %v344
        %v504 = vpop.f32.mrf.mxu0
        %v505 = vadd.f32 0.0, %v504
        %506 = vmatmul.f32.gmra.mxu0 %v347
        %v507 = vpop.f32.mrf.mxu0
        %v508 = vadd.f32 0.0, %v507
        %509 = vmatmul.f32.gmra.mxu0 %v350
        %v510 = vpop.f32.mrf.mxu0
        %v511 = vadd.f32 0.0, %v510
        %512 = vmatmul.f32.gmra.mxu0 %v353
        %v513 = vpop.f32.mrf.mxu0
        %v514 = vadd.f32 0.0, %v513
        %515 = vmatmul.f32.gmra.mxu0 %v356
        %v516 = vpop.f32.mrf.mxu0
        %v517 = vadd.f32 0.0, %v516
        %518 = vmatmul.f32.gmra.mxu0 %v359
        %v519 = vpop.f32.mrf.mxu0
        %v520 = vadd.f32 0.0, %v519
        %521 = vmatmul.f32.gmra.mxu0 %v362
        %v522 = vpop.f32.mrf.mxu0
        %v523 = vadd.f32 0.0, %v522
        %524 = vmatmul.f32.gmra.mxu0 %v365
        %v525 = vpop.f32.mrf.mxu0
        %v526 = vadd.f32 0.0, %v525
        %527 = vmatmul.f32.gmra.mxu0 %v368
        %v528 = vpop.f32.mrf.mxu0
        %v529 = vadd.f32 0.0, %v528
        %530 = vmatmul.f32.gmra.mxu0 %v371
        %v531 = vpop.f32.mrf.mxu0
        %v532 = vadd.f32 0.0, %v531
        %533 = vmatmul.f32.gmra.mxu0 %v374
        %v534 = vpop.f32.mrf.mxu0
        %v535 = vadd.f32 0.0, %v534
        %536 = vmatmul.f32.gmra.mxu0 %v377
        %v537 = vpop.f32.mrf.mxu0
        %v538 = vadd.f32 0.0, %v537
        %539 = vmatmul.f32.gmra.mxu0 %v380
        %v540 = vpop.f32.mrf.mxu0
        %v541 = vadd.f32 0.0, %v540
        %542 = vmatmul.f32.gmra.mxu0 %v383
        %v543 = vpop.f32.mrf.mxu0
        %v544 = vadd.f32 0.0, %v543
        %545 = vmatmul.f32.gmra.mxu0 %v386
        %v546 = vpop.f32.mrf.mxu0
        %v547 = vadd.f32 0.0, %v546
        %548 = vmatmul.f32.gmra.mxu0 %v389
        %v549 = vpop.f32.mrf.mxu0
        %v550 = vadd.f32 0.0, %v549
        %551 = vmatmul.f32.gmra.mxu0 %v392
        %v552 = vpop.f32.mrf.mxu0
        %v553 = vadd.f32 0.0, %v552
        %554 = vmatmul.f32.gmra.mxu0 %v395
        %v555 = vpop.f32.mrf.mxu0
        %v556 = vadd.f32 0.0, %v555
        %557 = vmatmul.f32.gmra.mxu0 %v398
        %v558 = vpop.f32.mrf.mxu0
        %v559 = vadd.f32 0.0, %v558
        %560 = vmatmul.f32.gmra.mxu0 %v401
        %v561 = vpop.f32.mrf.mxu0
        %v562 = vadd.f32 0.0, %v561
        %563 = vmatmul.f32.gmra.mxu0 %v404
        %v564 = vpop.f32.mrf.mxu0
        %v565 = vadd.f32 0.0, %v564
        %566 = vmatmul.f32.gmra.mxu0 %v407
        %v567 = vpop.f32.mrf.mxu0
        %v568 = vadd.f32 0.0, %v567
        %569 = vmatmul.f32.gmra.mxu0 %v410
        %v570 = vpop.f32.mrf.mxu0
        %v571 = vadd.f32 0.0, %v570
        %572 = vmatmul.f32.gmra.mxu0 %v413
        %v573 = vpop.f32.mrf.mxu0
        %v574 = vadd.f32 0.0, %v573
        %575 = vmatmul.f32.gmra.mxu0 %v416
        %v576 = vpop.f32.mrf.mxu0
        %v577 = vadd.f32 0.0, %v576
        %578 = vdwg.mxu0
        %579 = vmatpush.msra.mxu0 0.0
        %580 = vmatpush.msra.mxu0 0.0
        %581 = vmatpush.msra.mxu0 0.0
        %582 = vmatpush.msra.mxu0 0.0
        %583 = vmatpush.msra.mxu0 0.0
        %584 = vmatpush.msra.mxu0 0.0
        %585 = vmatpush.msra.mxu0 0.0
        %586 = vmatpush.msra.mxu0 0.0
        %587 = vmatpush.msra.mxu0 0.0
        %588 = vmatpush.msra.mxu0 0.0
        %589 = vmatpush.msra.mxu0 0.0
        %590 = vmatpush.msra.mxu0 0.0
        %591 = vmatpush.msra.mxu0 0.0
        %592 = vmatpush.msra.mxu0 0.0
        %593 = vmatpush.msra.mxu0 0.0
        %594 = vmatpush.msra.mxu0 %v224
        %595 = vmatmul.f32.gmra.mxu0 %v275
        %v596 = vpop.f32.mrf.mxu0
        %v597 = vadd.f32 0.0, %v596
        %598 = vmatmul.f32.gmra.mxu0 %v278
        %v599 = vpop.f32.mrf.mxu0
        %v600 = vadd.f32 0.0, %v599
        %601 = vmatmul.f32.gmra.mxu0 %v281
        %v602 = vpop.f32.mrf.mxu0
        %v603 = vadd.f32 0.0, %v602
        %604 = vmatmul.f32.gmra.mxu0 %v284
        %v605 = vpop.f32.mrf.mxu0
        %v606 = vadd.f32 0.0, %v605
        %607 = vmatmul.f32.gmra.mxu0 %v287
        %v608 = vpop.f32.mrf.mxu0
        %v609 = vadd.f32 0.0, %v608
        %610 = vmatmul.f32.gmra.mxu0 %v290
        %v611 = vpop.f32.mrf.mxu0
        %v612 = vadd.f32 0.0, %v611
        %613 = vmatmul.f32.gmra.mxu0 %v293
        %v614 = vpop.f32.mrf.mxu0
        %v615 = vadd.f32 0.0, %v614
        %616 = vmatmul.f32.gmra.mxu0 %v296
        %v617 = vpop.f32.mrf.mxu0
        %v618 = vadd.f32 0.0, %v617
        %619 = vmatmul.f32.gmra.mxu0 %v299
        %v620 = vpop.f32.mrf.mxu0
        %v621 = vadd.f32 0.0, %v620
        %622 = vmatmul.f32.gmra.mxu0 %v302
        %v623 = vpop.f32.mrf.mxu0
        %v624 = vadd.f32 0.0, %v623
        %625 = vmatmul.f32.gmra.mxu0 %v305
        %v626 = vpop.f32.mrf.mxu0
        %v627 = vadd.f32 0.0, %v626
        %628 = vmatmul.f32.gmra.mxu0 %v308
        %v629 = vpop.f32.mrf.mxu0
        %v630 = vadd.f32 0.0, %v629
        %631 = vmatmul.f32.gmra.mxu0 %v311
        %v632 = vpop.f32.mrf.mxu0
        %v633 = vadd.f32 0.0, %v632
        %634 = vmatmul.f32.gmra.mxu0 %v314
        %v635 = vpop.f32.mrf.mxu0
        %v636 = vadd.f32 0.0, %v635
        %637 = vmatmul.f32.gmra.mxu0 %v317
        %v638 = vpop.f32.mrf.mxu0
        %v639 = vadd.f32 0.0, %v638
        %640 = vmatmul.f32.gmra.mxu0 %v320
        %v641 = vpop.f32.mrf.mxu0
        %v642 = vadd.f32 0.0, %v641
        %643 = vmatmul.f32.gmra.mxu0 %v323
        %v644 = vpop.f32.mrf.mxu0
        %v645 = vadd.f32 0.0, %v644
        %646 = vmatmul.f32.gmra.mxu0 %v326
        %v647 = vpop.f32.mrf.mxu0
        %v648 = vadd.f32 0.0, %v647
        %649 = vmatmul.f32.gmra.mxu0 %v329
        %v650 = vpop.f32.mrf.mxu0
        %v651 = vadd.f32 0.0, %v650
        %652 = vmatmul.f32.gmra.mxu0 %v332
        %v653 = vpop.f32.mrf.mxu0
        %v654 = vadd.f32 0.0, %v653
        %655 = vmatmul.f32.gmra.mxu0 %v335
        %v656 = vpop.f32.mrf.mxu0
        %v657 = vadd.f32 0.0, %v656
        %658 = vmatmul.f32.gmra.mxu0 %v338
        %v659 = vpop.f32.mrf.mxu0
        %v660 = vadd.f32 0.0, %v659
        %661 = vmatmul.f32.gmra.mxu0 %v341
        %v662 = vpop.f32.mrf.mxu0
        %v663 = vadd.f32 0.0, %v662
        %664 = vmatmul.f32.gmra.mxu0 %v344
        %v665 = vpop.f32.mrf.mxu0
        %v666 = vadd.f32 0.0, %v665
        %667 = vmatmul.f32.gmra.mxu0 %v347
        %v668 = vpop.f32.mrf.mxu0
        %v669 = vadd.f32 0.0, %v668
        %670 = vmatmul.f32.gmra.mxu0 %v350
        %v671 = vpop.f32.mrf.mxu0
        %v672 = vadd.f32 0.0, %v671
        %673 = vmatmul.f32.gmra.mxu0 %v353
        %v674 = vpop.f32.mrf.mxu0
        %v675 = vadd.f32 0.0, %v674
        %676 = vmatmul.f32.gmra.mxu0 %v356
        %v677 = vpop.f32.mrf.mxu0
        %v678 = vadd.f32 0.0, %v677
        %679 = vmatmul.f32.gmra.mxu0 %v359
        %v680 = vpop.f32.mrf.mxu0
        %v681 = vadd.f32 0.0, %v680
        %682 = vmatmul.f32.gmra.mxu0 %v362
        %v683 = vpop.f32.mrf.mxu0
        %v684 = vadd.f32 0.0, %v683
        %685 = vmatmul.f32.gmra.mxu0 %v365
        %v686 = vpop.f32.mrf.mxu0
        %v687 = vadd.f32 0.0, %v686
        %688 = vmatmul.f32.gmra.mxu0 %v368
        %v689 = vpop.f32.mrf.mxu0
        %v690 = vadd.f32 0.0, %v689
        %691 = vmatmul.f32.gmra.mxu0 %v371
        %v692 = vpop.f32.mrf.mxu0
        %v693 = vadd.f32 0.0, %v692
        %694 = vmatmul.f32.gmra.mxu0 %v374
        %v695 = vpop.f32.mrf.mxu0
        %v696 = vadd.f32 0.0, %v695
        %697 = vmatmul.f32.gmra.mxu0 %v377
        %v698 = vpop.f32.mrf.mxu0
        %v699 = vadd.f32 0.0, %v698
        %700 = vmatmul.f32.gmra.mxu0 %v380
        %v701 = vpop.f32.mrf.mxu0
        %v702 = vadd.f32 0.0, %v701
        %703 = vmatmul.f32.gmra.mxu0 %v383
        %v704 = vpop.f32.mrf.mxu0
        %v705 = vadd.f32 0.0, %v704
        %706 = vmatmul.f32.gmra.mxu0 %v386
        %v707 = vpop.f32.mrf.mxu0
        %v708 = vadd.f32 0.0, %v707
        %709 = vmatmul.f32.gmra.mxu0 %v389
        %v710 = vpop.f32.mrf.mxu0
        %v711 = vadd.f32 0.0, %v710
        %712 = vmatmul.f32.gmra.mxu0 %v392
        %v713 = vpop.f32.mrf.mxu0
        %v714 = vadd.f32 0.0, %v713
        %715 = vmatmul.f32.gmra.mxu0 %v395
        %v716 = vpop.f32.mrf.mxu0
        %v717 = vadd.f32 0.0, %v716
        %718 = vmatmul.f32.gmra.mxu0 %v398
        %v719 = vpop.f32.mrf.mxu0
        %v720 = vadd.f32 0.0, %v719
        %721 = vmatmul.f32.gmra.mxu0 %v401
        %v722 = vpop.f32.mrf.mxu0
        %v723 = vadd.f32 0.0, %v722
        %724 = vmatmul.f32.gmra.mxu0 %v404
        %v725 = vpop.f32.mrf.mxu0
        %v726 = vadd.f32 0.0, %v725
        %727 = vmatmul.f32.gmra.mxu0 %v407
        %v728 = vpop.f32.mrf.mxu0
        %v729 = vadd.f32 0.0, %v728
        %730 = vmatmul.f32.gmra.mxu0 %v410
        %v731 = vpop.f32.mrf.mxu0
        %v732 = vadd.f32 0.0, %v731
        %733 = vmatmul.f32.gmra.mxu0 %v413
        %v734 = vpop.f32.mrf.mxu0
        %v735 = vadd.f32 0.0, %v734
        %736 = vmatmul.f32.gmra.mxu0 %v416
        %v737 = vpop.f32.mrf.mxu0
        %v738 = vadd.f32 0.0, %v737
        %739 = vdwg.mxu0
        %v740 = vmax.f32 %v436, %v439
        %v741 = vmax.f32 %v740, %v442
        %v742 = vmax.f32 %v741, %v445
        %v743 = vrot.slane %v742, 4
        %v744 = vmax.f32 %v742, %v743
        %v745 = vrot.slane %v744, 2
        %v746 = vmax.f32 %v744, %v745
        %v747 = vrot.slane %v746, 1
        %v748 = vmax.f32 %v746, %v747
        %v749 = vmax.f32 %v597, %v600
        %v750 = vmax.f32 %v749, %v603
        %v751 = vmax.f32 %v750, %v606
        %v752 = vrot.slane %v751, 4
        %v753 = vmax.f32 %v751, %v752
        %v754 = vrot.slane %v753, 2
        %v755 = vmax.f32 %v753, %v754
        %v756 = vrot.slane %v755, 1
        %v757 = vmax.f32 %v755, %v756
        %v758 = vmax.f32 %v448, %v451
        %v759 = vmax.f32 %v758, %v454
        %v760 = vmax.f32 %v759, %v457
        %v761 = vrot.slane %v760, 4
        %v762 = vmax.f32 %v760, %v761
        %v763 = vrot.slane %v762, 2
        %v764 = vmax.f32 %v762, %v763
        %v765 = vrot.slane %v764, 1
        %v766 = vmax.f32 %v764, %v765
        %v767 = vmax.f32 %v609, %v612
        %v768 = vmax.f32 %v767, %v615
        %v769 = vmax.f32 %v768, %v618
        %v770 = vrot.slane %v769, 4
        %v771 = vmax.f32 %v769, %v770
        %v772 = vrot.slane %v771, 2
        %v773 = vmax.f32 %v771, %v772
        %v774 = vrot.slane %v773, 1
        %v775 = vmax.f32 %v773, %v774
        %v776 = vmax.f32 %v460, %v463
        %v777 = vmax.f32 %v776, %v466
        %v778 = vmax.f32 %v777, %v469
        %v779 = vrot.slane %v778, 4
        %v780 = vmax.f32 %v778, %v779
        %v781 = vrot.slane %v780, 2
        %v782 = vmax.f32 %v780, %v781
        %v783 = vrot.slane %v782, 1
        %v784 = vmax.f32 %v782, %v783
        %v785 = vmax.f32 %v621, %v624
        %v786 = vmax.f32 %v785, %v627
        %v787 = vmax.f32 %v786, %v630
        %v788 = vrot.slane %v787, 4
        %v789 = vmax.f32 %v787, %v788
        %v790 = vrot.slane %v789, 2
        %v791 = vmax.f32 %v789, %v790
        %v792 = vrot.slane %v791, 1
        %v793 = vmax.f32 %v791, %v792
        %v794 = vmax.f32 %v472, %v475
        %v795 = vmax.f32 %v794, %v478
        %v796 = vmax.f32 %v795, %v481
        %v797 = vrot.slane %v796, 4
        %v798 = vmax.f32 %v796, %v797
        %v799 = vrot.slane %v798, 2
        %v800 = vmax.f32 %v798, %v799
        %v801 = vrot.slane %v800, 1
        %v802 = vmax.f32 %v800, %v801
        %v803 = vmax.f32 %v633, %v636
        %v804 = vmax.f32 %v803, %v639
        %v805 = vmax.f32 %v804, %v642
        %v806 = vrot.slane %v805, 4
        %v807 = vmax.f32 %v805, %v806
        %v808 = vrot.slane %v807, 2
        %v809 = vmax.f32 %v807, %v808
        %v810 = vrot.slane %v809, 1
        %v811 = vmax.f32 %v809, %v810
        %v812 = vsub.f32 %v436, %v748
        %v813 = vsub.f32 %v597, %v757
        %v814 = vsub.f32 %v439, %v748
        %v815 = vsub.f32 %v600, %v757
        %v816 = vsub.f32 %v442, %v748
        %v817 = vsub.f32 %v603, %v757
        %v818 = vsub.f32 %v445, %v748
        %v819 = vsub.f32 %v606, %v757
        %v820 = vsub.f32 %v448, %v766
        %v821 = vsub.f32 %v609, %v775
        %v822 = vsub.f32 %v451, %v766
        %v823 = vsub.f32 %v612, %v775
        %v824 = vsub.f32 %v454, %v766
        %v825 = vsub.f32 %v615, %v775
        %v826 = vsub.f32 %v457, %v766
        %v827 = vsub.f32 %v618, %v775
        %v828 = vsub.f32 %v460, %v784
        %v829 = vsub.f32 %v621, %v793
        %v830 = vsub.f32 %v463, %v784
        %v831 = vsub.f32 %v624, %v793
        %v832 = vsub.f32 %v466, %v784
        %v833 = vsub.f32 %v627, %v793
        %v834 = vsub.f32 %v469, %v784
        %v835 = vsub.f32 %v630, %v793
        %v836 = vsub.f32 %v472, %v802
        %v837 = vsub.f32 %v633, %v811
        %v838 = vsub.f32 %v475, %v802
        %v839 = vsub.f32 %v636, %v811
        %v840 = vsub.f32 %v478, %v802
        %v841 = vsub.f32 %v639, %v811
        %v842 = vsub.f32 %v481, %v802
        %v843 = vsub.f32 %v642, %v811
        %v844 = vmul.f32 %v812, 1.442695
        %v845 = vpow.pop %v844
        %v846 = vmul.f32 %v813, 1.442695
        %v847 = vpow.pop %v846
        %v848 = vmul.f32 %v814, 1.442695
        %v849 = vpow.pop %v848
        %v850 = vmul.f32 %v815, 1.442695
        %v851 = vpow.pop %v850
        %v852 = vmul.f32 %v816, 1.442695
        %v853 = vpow.pop %v852
        %v854 = vmul.f32 %v817, 1.442695
        %v855 = vpow.pop %v854
        %v856 = vmul.f32 %v818, 1.442695
        %v857 = vpow.pop %v856
        %v858 = vmul.f32 %v819, 1.442695
        %v859 = vpow.pop %v858
        %v860 = vmul.f32 %v820, 1.442695
        %v861 = vpow.pop %v860
        %v862 = vmul.f32 %v821, 1.442695
        %v863 = vpow.pop %v862
        %v864 = vmul.f32 %v822, 1.442695
        %v865 = vpow.pop %v864
        %v866 = vmul.f32 %v823, 1.442695
        %v867 = vpow.pop %v866
        %v868 = vmul.f32 %v824, 1.442695
        %v869 = vpow.pop %v868
        %v870 = vmul.f32 %v825, 1.442695
        %v871 = vpow.pop %v870
        %v872 = vmul.f32 %v826, 1.442695
        %v873 = vpow.pop %v872
        %v874 = vmul.f32 %v827, 1.442695
        %v875 = vpow.pop %v874
        %v876 = vmul.f32 %v828, 1.442695
        %v877 = vpow.pop %v876
        %v878 = vmul.f32 %v829, 1.442695
        %v879 = vpow.pop %v878
        %v880 = vmul.f32 %v830, 1.442695
        %v881 = vpow.pop %v880
        %v882 = vmul.f32 %v831, 1.442695
        %v883 = vpow.pop %v882
        %v884 = vmul.f32 %v832, 1.442695
        %v885 = vpow.pop %v884
        %v886 = vmul.f32 %v833, 1.442695
        %v887 = vpow.pop %v886
        %v888 = vmul.f32 %v834, 1.442695
        %v889 = vpow.pop %v888
        %v890 = vmul.f32 %v835, 1.442695
        %v891 = vpow.pop %v890
        %v892 = vmul.f32 %v836, 1.442695
        %v893 = vpow.pop %v892
        %v894 = vmul.f32 %v837, 1.442695
        %v895 = vpow.pop %v894
        %v896 = vmul.f32 %v838, 1.442695
        %v897 = vpow.pop %v896
        %v898 = vmul.f32 %v839, 1.442695
        %v899 = vpow.pop %v898
        %v900 = vmul.f32 %v840, 1.442695
        %v901 = vpow.pop %v900
        %v902 = vmul.f32 %v841, 1.442695
        %v903 = vpow.pop %v902
        %v904 = vmul.f32 %v842, 1.442695
        %v905 = vpow.pop %v904
        %v906 = vmul.f32 %v843, 1.442695
        %v907 = vpow.pop %v906
        %v908 = vadd.f32 %v845, %v849
        %v909 = vadd.f32 %v908, %v853
        %v910 = vadd.f32 %v909, %v857
        %v911 = vrot.slane %v910, 4
        %v912 = vadd.f32 %v910, %v911
        %v913 = vrot.slane %v912, 2
        %v914 = vadd.f32 %v912, %v913
        %v915 = vrot.slane %v914, 1
        %v916 = vadd.f32 %v914, %v915
        %v917 = vadd.f32 %v847, %v851
        %v918 = vadd.f32 %v917, %v855
        %v919 = vadd.f32 %v918, %v859
        %v920 = vrot.slane %v919, 4
        %v921 = vadd.f32 %v919, %v920
        %v922 = vrot.slane %v921, 2
        %v923 = vadd.f32 %v921, %v922
        %v924 = vrot.slane %v923, 1
        %v925 = vadd.f32 %v923, %v924
        %v926 = vadd.f32 %v861, %v865
        %v927 = vadd.f32 %v926, %v869
        %v928 = vadd.f32 %v927, %v873
        %v929 = vrot.slane %v928, 4
        %v930 = vadd.f32 %v928, %v929
        %v931 = vrot.slane %v930, 2
        %v932 = vadd.f32 %v930, %v931
        %v933 = vrot.slane %v932, 1
        %v934 = vadd.f32 %v932, %v933
        %v935 = vadd.f32 %v863, %v867
        %v936 = vadd.f32 %v935, %v871
        %v937 = vadd.f32 %v936, %v875
        %v938 = vrot.slane %v937, 4
        %v939 = vadd.f32 %v937, %v938
        %v940 = vrot.slane %v939, 2
        %v941 = vadd.f32 %v939, %v940
        %v942 = vrot.slane %v941, 1
        %v943 = vadd.f32 %v941, %v942
        %v944 = vadd.f32 %v877, %v881
        %v945 = vadd.f32 %v944, %v885
        %v946 = vadd.f32 %v945, %v889
        %v947 = vrot.slane %v946, 4
        %v948 = vadd.f32 %v946, %v947
        %v949 = vrot.slane %v948, 2
        %v950 = vadd.f32 %v948, %v949
        %v951 = vrot.slane %v950, 1
        %v952 = vadd.f32 %v950, %v951
        %v953 = vadd.f32 %v879, %v883
        %v954 = vadd.f32 %v953, %v887
        %v955 = vadd.f32 %v954, %v891
        %v956 = vrot.slane %v955, 4
        %v957 = vadd.f32 %v955, %v956
        %v958 = vrot.slane %v957, 2
        %v959 = vadd.f32 %v957, %v958
        %v960 = vrot.slane %v959, 1
        %v961 = vadd.f32 %v959, %v960
        %v962 = vadd.f32 %v893, %v897
        %v963 = vadd.f32 %v962, %v901
        %v964 = vadd.f32 %v963, %v905
        %v965 = vrot.slane %v964, 4
        %v966 = vadd.f32 %v964, %v965
        %v967 = vrot.slane %v966, 2
        %v968 = vadd.f32 %v966, %v967
        %v969 = vrot.slane %v968, 1
        %v970 = vadd.f32 %v968, %v969
        %v971 = vadd.f32 %v895, %v899
        %v972 = vadd.f32 %v971, %v903
        %v973 = vadd.f32 %v972, %v907
        %v974 = vrot.slane %v973, 4
        %v975 = vadd.f32 %v973, %v974
        %v976 = vrot.slane %v975, 2
        %v977 = vadd.f32 %v975, %v976
        %v978 = vrot.slane %v977, 1
        %v979 = vadd.f32 %v977, %v978
        %v980 = vrcp.pop %v916
        %v981 = vrcp.pop %v925
        %v982 = vrcp.pop %v934
        %v983 = vrcp.pop %v943
        %v984 = vrcp.pop %v952
        %v985 = vrcp.pop %v961
        %v986 = vrcp.pop %v970
        %v987 = vrcp.pop %v979
        %v988 = vmul.f32 %v916, %v980
        %v989 = vmul.f32 %v925, %v981
        %v990 = vmul.f32 %v934, %v982
        %v991 = vmul.f32 %v943, %v983
        %v992 = vmul.f32 %v952, %v984
        %v993 = vmul.f32 %v961, %v985
        %v994 = vmul.f32 %v970, %v986
        %v995 = vmul.f32 %v979, %v987
        %v996 = vsub.f32 2.0, %v988
        %v997 = vsub.f32 2.0, %v989
        %v998 = vsub.f32 2.0, %v990
        %v999 = vsub.f32 2.0, %v991
        %v1000 = vsub.f32 2.0, %v992
        %v1001 = vsub.f32 2.0, %v993
        %v1002 = vsub.f32 2.0, %v994
        %v1003 = vsub.f32 2.0, %v995
        %v1004 = vmul.f32 %v980, %v996
        %v1005 = vmul.f32 %v981, %v997
        %v1006 = vmul.f32 %v982, %v998
        %v1007 = vmul.f32 %v983, %v999
        %v1008 = vmul.f32 %v984, %v1000
        %v1009 = vmul.f32 %v985, %v1001
        %v1010 = vmul.f32 %v986, %v1002
        %v1011 = vmul.f32 %v987, %v1003
        %v1012 = vmul.f32 %v845, %v1004
        %v1013 = vmul.f32 %v847, %v1005
        %v1014 = vmul.f32 %v849, %v1004
        %v1015 = vmul.f32 %v851, %v1005
        %v1016 = vmul.f32 %v853, %v1004
        %v1017 = vmul.f32 %v855, %v1005
        %v1018 = vmul.f32 %v857, %v1004
        %v1019 = vmul.f32 %v859, %v1005
        %v1020 = vmul.f32 %v861, %v1006
        %v1021 = vmul.f32 %v863, %v1007
        %v1022 = vmul.f32 %v865, %v1006
        %v1023 = vmul.f32 %v867, %v1007
        %v1024 = vmul.f32 %v869, %v1006
        %v1025 = vmul.f32 %v871, %v1007
        %v1026 = vmul.f32 %v873, %v1006
        %v1027 = vmul.f32 %v875, %v1007
        %v1028 = vmul.f32 %v877, %v1008
        %v1029 = vmul.f32 %v879, %v1009
        %v1030 = vmul.f32 %v881, %v1008
        %v1031 = vmul.f32 %v883, %v1009
        %v1032 = vmul.f32 %v885, %v1008
        %v1033 = vmul.f32 %v887, %v1009
        %v1034 = vmul.f32 %v889, %v1008
        %v1035 = vmul.f32 %v891, %v1009
        %v1036 = vmul.f32 %v893, %v1010
        %v1037 = vmul.f32 %v895, %v1011
        %v1038 = vmul.f32 %v897, %v1010
        %v1039 = vmul.f32 %v899, %v1011
        %v1040 = vmul.f32 %v901, %v1010
        %v1041 = vmul.f32 %v903, %v1011
        %v1042 = vmul.f32 %v905, %v1010
        %v1043 = vmul.f32 %v907, %v1011
        %v1044 = vmax.f32 %v484, %v645
        %1045 = vmax.xlane.f32.xlu0 %v1044
        %v1046 = vpop.xlane.xlu0 %1045
        %v1047 = vmax.f32 %v487, %v648
        %1048 = vmax.xlane.f32.xlu0 %v1047
        %v1049 = vpop.xlane.xlu0 %1048
        %v1050 = vmax.f32 %v490, %v651
        %1051 = vmax.xlane.f32.xlu0 %v1050
        %v1052 = vpop.xlane.xlu0 %1051
        %v1053 = vmax.f32 %v493, %v654
        %1054 = vmax.xlane.f32.xlu0 %v1053
        %v1055 = vpop.xlane.xlu0 %1054
        %v1056 = vmax.f32 %v496, %v657
        %1057 = vmax.xlane.f32.xlu0 %v1056
        %v1058 = vpop.xlane.xlu0 %1057
        %v1059 = vmax.f32 %v499, %v660
        %1060 = vmax.xlane.f32.xlu0 %v1059
        %v1061 = vpop.xlane.xlu0 %1060
        %v1062 = vmax.f32 %v502, %v663
        %1063 = vmax.xlane.f32.xlu0 %v1062
        %v1064 = vpop.xlane.xlu0 %1063
        %v1065 = vmax.f32 %v505, %v666
        %1066 = vmax.xlane.f32.xlu0 %v1065
        %v1067 = vpop.xlane.xlu0 %1066
        %v1068 = vmax.f32 %v508, %v669
        %1069 = vmax.xlane.f32.xlu0 %v1068
        %v1070 = vpop.xlane.xlu0 %1069
        %v1071 = vmax.f32 %v511, %v672
        %1072 = vmax.xlane.f32.xlu0 %v1071
        %v1073 = vpop.xlane.xlu0 %1072
        %v1074 = vmax.f32 %v514, %v675
        %1075 = vmax.xlane.f32.xlu0 %v1074
        %v1076 = vpop.xlane.xlu0 %1075
        %v1077 = vmax.f32 %v517, %v678
        %1078 = vmax.xlane.f32.xlu0 %v1077
        %v1079 = vpop.xlane.xlu0 %1078
        %v1080 = vmax.f32 %v520, %v681
        %1081 = vmax.xlane.f32.xlu0 %v1080
        %v1082 = vpop.xlane.xlu0 %1081
        %v1083 = vmax.f32 %v523, %v684
        %1084 = vmax.xlane.f32.xlu0 %v1083
        %v1085 = vpop.xlane.xlu0 %1084
        %v1086 = vmax.f32 %v526, %v687
        %1087 = vmax.xlane.f32.xlu0 %v1086
        %v1088 = vpop.xlane.xlu0 %1087
        %v1089 = vmax.f32 %v529, %v690
        %1090 = vmax.xlane.f32.xlu0 %v1089
        %v1091 = vpop.xlane.xlu0 %1090
        %v1092 = vsub.f32 %v484, %v1046
        %v1093 = vsub.f32 %v645, %v1046
        %v1094 = vsub.f32 %v487, %v1049
        %v1095 = vsub.f32 %v648, %v1049
        %v1096 = vsub.f32 %v490, %v1052
        %v1097 = vsub.f32 %v651, %v1052
        %v1098 = vsub.f32 %v493, %v1055
        %v1099 = vsub.f32 %v654, %v1055
        %v1100 = vsub.f32 %v496, %v1058
        %v1101 = vsub.f32 %v657, %v1058
        %v1102 = vsub.f32 %v499, %v1061
        %v1103 = vsub.f32 %v660, %v1061
        %v1104 = vsub.f32 %v502, %v1064
        %v1105 = vsub.f32 %v663, %v1064
        %v1106 = vsub.f32 %v505, %v1067
        %v1107 = vsub.f32 %v666, %v1067
        %v1108 = vsub.f32 %v508, %v1070
        %v1109 = vsub.f32 %v669, %v1070
        %v1110 = vsub.f32 %v511, %v1073
        %v1111 = vsub.f32 %v672, %v1073
        %v1112 = vsub.f32 %v514, %v1076
        %v1113 = vsub.f32 %v675, %v1076
        %v1114 = vsub.f32 %v517, %v1079
        %v1115 = vsub.f32 %v678, %v1079
        %v1116 = vsub.f32 %v520, %v1082
        %v1117 = vsub.f32 %v681, %v1082
        %v1118 = vsub.f32 %v523, %v1085
        %v1119 = vsub.f32 %v684, %v1085
        %v1120 = vsub.f32 %v526, %v1088
        %v1121 = vsub.f32 %v687, %v1088
        %v1122 = vsub.f32 %v529, %v1091
        %v1123 = vsub.f32 %v690, %v1091
        %v1124 = vmul.f32 %v1092, 1.442695
        %v1125 = vpow.pop %v1124
        %v1126 = vmul.f32 %v1093, 1.442695
        %v1127 = vpow.pop %v1126
        %v1128 = vmul.f32 %v1094, 1.442695
        %v1129 = vpow.pop %v1128
        %v1130 = vmul.f32 %v1095, 1.442695
        %v1131 = vpow.pop %v1130
        %v1132 = vmul.f32 %v1096, 1.442695
        %v1133 = vpow.pop %v1132
        %v1134 = vmul.f32 %v1097, 1.442695
        %v1135 = vpow.pop %v1134
        %v1136 = vmul.f32 %v1098, 1.442695
        %v1137 = vpow.pop %v1136
        %v1138 = vmul.f32 %v1099, 1.442695
        %v1139 = vpow.pop %v1138
        %v1140 = vmul.f32 %v1100, 1.442695
        %v1141 = vpow.pop %v1140
        %v1142 = vmul.f32 %v1101, 1.442695
        %v1143 = vpow.pop %v1142
        %v1144 = vmul.f32 %v1102, 1.442695
        %v1145 = vpow.pop %v1144
        %v1146 = vmul.f32 %v1103, 1.442695
        %v1147 = vpow.pop %v1146
        %v1148 = vmul.f32 %v1104, 1.442695
        %v1149 = vpow.pop %v1148
        %v1150 = vmul.f32 %v1105, 1.442695
        %v1151 = vpow.pop %v1150
        %v1152 = vmul.f32 %v1106, 1.442695
        %v1153 = vpow.pop %v1152
        %v1154 = vmul.f32 %v1107, 1.442695
        %v1155 = vpow.pop %v1154
        %v1156 = vmul.f32 %v1108, 1.442695
        %v1157 = vpow.pop %v1156
        %v1158 = vmul.f32 %v1109, 1.442695
        %v1159 = vpow.pop %v1158
        %v1160 = vmul.f32 %v1110, 1.442695
        %v1161 = vpow.pop %v1160
        %v1162 = vmul.f32 %v1111, 1.442695
        %v1163 = vpow.pop %v1162
        %v1164 = vmul.f32 %v1112, 1.442695
        %v1165 = vpow.pop %v1164
        %v1166 = vmul.f32 %v1113, 1.442695
        %v1167 = vpow.pop %v1166
        %v1168 = vmul.f32 %v1114, 1.442695
        %v1169 = vpow.pop %v1168
        %v1170 = vmul.f32 %v1115, 1.442695
        %v1171 = vpow.pop %v1170
        %v1172 = vmul.f32 %v1116, 1.442695
        %v1173 = vpow.pop %v1172
        %v1174 = vmul.f32 %v1117, 1.442695
        %v1175 = vpow.pop %v1174
        %v1176 = vmul.f32 %v1118, 1.442695
        %v1177 = vpow.pop %v1176
        %v1178 = vmul.f32 %v1119, 1.442695
        %v1179 = vpow.pop %v1178
        %v1180 = vmul.f32 %v1120, 1.442695
        %v1181 = vpow.pop %v1180
        %v1182 = vmul.f32 %v1121, 1.442695
        %v1183 = vpow.pop %v1182
        %v1184 = vmul.f32 %v1122, 1.442695
        %v1185 = vpow.pop %v1184
        %v1186 = vmul.f32 %v1123, 1.442695
        %v1187 = vpow.pop %v1186
        %v1188 = vadd.f32 %v1125, %v1127
        %1189 = vadd.xlane.f32.xlu0 %v1188
        %v1190 = vpop.xlane.xlu0 %1189
        %v1191 = vadd.f32 %v1129, %v1131
        %1192 = vadd.xlane.f32.xlu0 %v1191
        %v1193 = vpop.xlane.xlu0 %1192
        %v1194 = vadd.f32 %v1133, %v1135
        %1195 = vadd.xlane.f32.xlu0 %v1194
        %v1196 = vpop.xlane.xlu0 %1195
        %v1197 = vadd.f32 %v1137, %v1139
        %1198 = vadd.xlane.f32.xlu0 %v1197
        %v1199 = vpop.xlane.xlu0 %1198
        %v1200 = vadd.f32 %v1141, %v1143
        %1201 = vadd.xlane.f32.xlu0 %v1200
        %v1202 = vpop.xlane.xlu0 %1201
        %v1203 = vadd.f32 %v1145, %v1147
        %1204 = vadd.xlane.f32.xlu0 %v1203
        %v1205 = vpop.xlane.xlu0 %1204
        %v1206 = vadd.f32 %v1149, %v1151
        %1207 = vadd.xlane.f32.xlu0 %v1206
        %v1208 = vpop.xlane.xlu0 %1207
        %v1209 = vadd.f32 %v1153, %v1155
        %1210 = vadd.xlane.f32.xlu0 %v1209
        %v1211 = vpop.xlane.xlu0 %1210
        %v1212 = vadd.f32 %v1157, %v1159
        %1213 = vadd.xlane.f32.xlu0 %v1212
        %v1214 = vpop.xlane.xlu0 %1213
        %v1215 = vadd.f32 %v1161, %v1163
        %1216 = vadd.xlane.f32.xlu0 %v1215
        %v1217 = vpop.xlane.xlu0 %1216
        %v1218 = vadd.f32 %v1165, %v1167
        %1219 = vadd.xlane.f32.xlu0 %v1218
        %v1220 = vpop.xlane.xlu0 %1219
        %v1221 = vadd.f32 %v1169, %v1171
        %1222 = vadd.xlane.f32.xlu0 %v1221
        %v1223 = vpop.xlane.xlu0 %1222
        %v1224 = vadd.f32 %v1173, %v1175
        %1225 = vadd.xlane.f32.xlu0 %v1224
        %v1226 = vpop.xlane.xlu0 %1225
        %v1227 = vadd.f32 %v1177, %v1179
        %1228 = vadd.xlane.f32.xlu0 %v1227
        %v1229 = vpop.xlane.xlu0 %1228
        %v1230 = vadd.f32 %v1181, %v1183
        %1231 = vadd.xlane.f32.xlu0 %v1230
        %v1232 = vpop.xlane.xlu0 %1231
        %v1233 = vadd.f32 %v1185, %v1187
        %1234 = vadd.xlane.f32.xlu0 %v1233
        %v1235 = vpop.xlane.xlu0 %1234
        %v1236 = vrcp.pop %v1190
        %v1237 = vrcp.pop %v1193
        %v1238 = vrcp.pop %v1196
        %v1239 = vrcp.pop %v1199
        %v1240 = vrcp.pop %v1202
        %v1241 = vrcp.pop %v1205
        %v1242 = vrcp.pop %v1208
        %v1243 = vrcp.pop %v1211
        %v1244 = vrcp.pop %v1214
        %v1245 = vrcp.pop %v1217
        %v1246 = vrcp.pop %v1220
        %v1247 = vrcp.pop %v1223
        %v1248 = vrcp.pop %v1226
        %v1249 = vrcp.pop %v1229
        %v1250 = vrcp.pop %v1232
        %v1251 = vrcp.pop %v1235
        %v1252 = vmul.f32 %v1190, %v1236
        %v1253 = vmul.f32 %v1193, %v1237
        %v1254 = vmul.f32 %v1196, %v1238
        %v1255 = vmul.f32 %v1199, %v1239
        %v1256 = vmul.f32 %v1202, %v1240
        %v1257 = vmul.f32 %v1205, %v1241
        %v1258 = vmul.f32 %v1208, %v1242
        %v1259 = vmul.f32 %v1211, %v1243
        %v1260 = vmul.f32 %v1214, %v1244
        %v1261 = vmul.f32 %v1217, %v1245
        %v1262 = vmul.f32 %v1220, %v1246
        %v1263 = vmul.f32 %v1223, %v1247
        %v1264 = vmul.f32 %v1226, %v1248
        %v1265 = vmul.f32 %v1229, %v1249
        %v1266 = vmul.f32 %v1232, %v1250
        %v1267 = vmul.f32 %v1235, %v1251
        %v1268 = vsub.f32 2.0, %v1252
        %v1269 = vsub.f32 2.0, %v1253
        %v1270 = vsub.f32 2.0, %v1254
        %v1271 = vsub.f32 2.0, %v1255
        %v1272 = vsub.f32 2.0, %v1256
        %v1273 = vsub.f32 2.0, %v1257
        %v1274 = vsub.f32 2.0, %v1258
        %v1275 = vsub.f32 2.0, %v1259
        %v1276 = vsub.f32 2.0, %v1260
        %v1277 = vsub.f32 2.0, %v1261
        %v1278 = vsub.f32 2.0, %v1262
        %v1279 = vsub.f32 2.0, %v1263
        %v1280 = vsub.f32 2.0, %v1264
        %v1281 = vsub.f32 2.0, %v1265
        %v1282 = vsub.f32 2.0, %v1266
        %v1283 = vsub.f32 2.0, %v1267
        %v1284 = vmul.f32 %v1236, %v1268
        %v1285 = vmul.f32 %v1237, %v1269
        %v1286 = vmul.f32 %v1238, %v1270
        %v1287 = vmul.f32 %v1239, %v1271
        %v1288 = vmul.f32 %v1240, %v1272
        %v1289 = vmul.f32 %v1241, %v1273
        %v1290 = vmul.f32 %v1242, %v1274
        %v1291 = vmul.f32 %v1243, %v1275
        %v1292 = vmul.f32 %v1244, %v1276
        %v1293 = vmul.f32 %v1245, %v1277
        %v1294 = vmul.f32 %v1246, %v1278
        %v1295 = vmul.f32 %v1247, %v1279
        %v1296 = vmul.f32 %v1248, %v1280
        %v1297 = vmul.f32 %v1249, %v1281
        %v1298 = vmul.f32 %v1250, %v1282
        %v1299 = vmul.f32 %v1251, %v1283
        %v1300 = vmul.f32 %v1125, %v1284
        %v1301 = vmul.f32 %v1127, %v1284
        %v1302 = vmul.f32 %v1129, %v1285
        %v1303 = vmul.f32 %v1131, %v1285
        %v1304 = vmul.f32 %v1133, %v1286
        %v1305 = vmul.f32 %v1135, %v1286
        %v1306 = vmul.f32 %v1137, %v1287
        %v1307 = vmul.f32 %v1139, %v1287
        %v1308 = vmul.f32 %v1141, %v1288
        %v1309 = vmul.f32 %v1143, %v1288
        %v1310 = vmul.f32 %v1145, %v1289
        %v1311 = vmul.f32 %v1147, %v1289
        %v1312 = vmul.f32 %v1149, %v1290
        %v1313 = vmul.f32 %v1151, %v1290
        %v1314 = vmul.f32 %v1153, %v1291
        %v1315 = vmul.f32 %v1155, %v1291
        %v1316 = vmul.f32 %v1157, %v1292
        %v1317 = vmul.f32 %v1159, %v1292
        %v1318 = vmul.f32 %v1161, %v1293
        %v1319 = vmul.f32 %v1163, %v1293
        %v1320 = vmul.f32 %v1165, %v1294
        %v1321 = vmul.f32 %v1167, %v1294
        %v1322 = vmul.f32 %v1169, %v1295
        %v1323 = vmul.f32 %v1171, %v1295
        %v1324 = vmul.f32 %v1173, %v1296
        %v1325 = vmul.f32 %v1175, %v1296
        %v1326 = vmul.f32 %v1177, %v1297
        %v1327 = vmul.f32 %v1179, %v1297
        %v1328 = vmul.f32 %v1181, %v1298
        %v1329 = vmul.f32 %v1183, %v1298
        %v1330 = vmul.f32 %v1185, %v1299
        %v1331 = vmul.f32 %v1187, %v1299
        %1332 = vmatpush.xpose.msra.mxu0 0.0
        %1333 = vmatpush.xpose.msra.mxu0 0.0
        %1334 = vmatpush.xpose.msra.mxu0 0.0
        %1335 = vmatpush.xpose.msra.mxu0 0.0
        %1336 = vmatpush.xpose.msra.mxu0 0.0
        %1337 = vmatpush.xpose.msra.mxu0 0.0
        %1338 = vmatpush.xpose.msra.mxu0 0.0
        %1339 = vmatpush.xpose.msra.mxu0 0.0
        %1340 = vmatpush.xpose.msra.mxu0 0.0
        %1341 = vmatpush.xpose.msra.mxu0 0.0
        %1342 = vmatpush.xpose.msra.mxu0 0.0
        %1343 = vmatpush.xpose.msra.mxu0 0.0
        %1344 = vmatpush.xpose.msra.mxu0 %v541
        %1345 = vmatpush.xpose.msra.mxu0 %v538
        %1346 = vmatpush.xpose.msra.mxu0 %v535
        %1347 = vmatpush.xpose.msra.mxu0 %v532
        %1348 = vmatmul.f32.gmra.mxu0 %v1300
        %v1349 = vpop.f32.mrf.mxu0
        %v1350 = vadd.f32 0.0, %v1349
        %1351 = vmatmul.f32.gmra.mxu0 %v1302
        %v1352 = vpop.f32.mrf.mxu0
        %v1353 = vadd.f32 0.0, %v1352
        %1354 = vmatmul.f32.gmra.mxu0 %v1304
        %v1355 = vpop.f32.mrf.mxu0
        %v1356 = vadd.f32 0.0, %v1355
        %1357 = vmatmul.f32.gmra.mxu0 %v1306
        %v1358 = vpop.f32.mrf.mxu0
        %v1359 = vadd.f32 0.0, %v1358
        %1360 = vdwg.mxu0
        %1361 = vmatpush.xpose.msra.mxu0 0.0
        %1362 = vmatpush.xpose.msra.mxu0 0.0
        %1363 = vmatpush.xpose.msra.mxu0 0.0
        %1364 = vmatpush.xpose.msra.mxu0 0.0
        %1365 = vmatpush.xpose.msra.mxu0 0.0
        %1366 = vmatpush.xpose.msra.mxu0 0.0
        %1367 = vmatpush.xpose.msra.mxu0 0.0
        %1368 = vmatpush.xpose.msra.mxu0 0.0
        %1369 = vmatpush.xpose.msra.mxu0 0.0
        %1370 = vmatpush.xpose.msra.mxu0 0.0
        %1371 = vmatpush.xpose.msra.mxu0 0.0
        %1372 = vmatpush.xpose.msra.mxu0 0.0
        %1373 = vmatpush.xpose.msra.mxu0 %v702
        %1374 = vmatpush.xpose.msra.mxu0 %v699
        %1375 = vmatpush.xpose.msra.mxu0 %v696
        %1376 = vmatpush.xpose.msra.mxu0 %v693
        %1377 = vmatmul.f32.gmra.mxu0 %v1301
        %v1378 = vpop.f32.mrf.mxu0
        %v1379 = vadd.f32 %v1350, %v1378
        %1380 = vmatmul.f32.gmra.mxu0 %v1303
        %v1381 = vpop.f32.mrf.mxu0
        %v1382 = vadd.f32 %v1353, %v1381
        %1383 = vmatmul.f32.gmra.mxu0 %v1305
        %v1384 = vpop.f32.mrf.mxu0
        %v1385 = vadd.f32 %v1356, %v1384
        %1386 = vmatmul.f32.gmra.mxu0 %v1307
        %v1387 = vpop.f32.mrf.mxu0
        %v1388 = vadd.f32 %v1359, %v1387
        %1389 = vdwg.mxu0
        %1390 = vmatpush.xpose.msra.mxu0 0.0
        %1391 = vmatpush.xpose.msra.mxu0 0.0
        %1392 = vmatpush.xpose.msra.mxu0 0.0
        %1393 = vmatpush.xpose.msra.mxu0 0.0
        %1394 = vmatpush.xpose.msra.mxu0 0.0
        %1395 = vmatpush.xpose.msra.mxu0 0.0
        %1396 = vmatpush.xpose.msra.mxu0 0.0
        %1397 = vmatpush.xpose.msra.mxu0 0.0
        %1398 = vmatpush.xpose.msra.mxu0 0.0
        %1399 = vmatpush.xpose.msra.mxu0 0.0
        %1400 = vmatpush.xpose.msra.mxu0 0.0
        %1401 = vmatpush.xpose.msra.mxu0 0.0
        %1402 = vmatpush.xpose.msra.mxu0 %v553
        %1403 = vmatpush.xpose.msra.mxu0 %v550
        %1404 = vmatpush.xpose.msra.mxu0 %v547
        %1405 = vmatpush.xpose.msra.mxu0 %v544
        %1406 = vmatmul.f32.gmra.mxu0 %v1308
        %v1407 = vpop.f32.mrf.mxu0
        %v1408 = vadd.f32 0.0, %v1407
        %1409 = vmatmul.f32.gmra.mxu0 %v1310
        %v1410 = vpop.f32.mrf.mxu0
        %v1411 = vadd.f32 0.0, %v1410
        %1412 = vmatmul.f32.gmra.mxu0 %v1312
        %v1413 = vpop.f32.mrf.mxu0
        %v1414 = vadd.f32 0.0, %v1413
        %1415 = vmatmul.f32.gmra.mxu0 %v1314
        %v1416 = vpop.f32.mrf.mxu0
        %v1417 = vadd.f32 0.0, %v1416
        %1418 = vdwg.mxu0
        %1419 = vmatpush.xpose.msra.mxu0 0.0
        %1420 = vmatpush.xpose.msra.mxu0 0.0
        %1421 = vmatpush.xpose.msra.mxu0 0.0
        %1422 = vmatpush.xpose.msra.mxu0 0.0
        %1423 = vmatpush.xpose.msra.mxu0 0.0
        %1424 = vmatpush.xpose.msra.mxu0 0.0
        %1425 = vmatpush.xpose.msra.mxu0 0.0
        %1426 = vmatpush.xpose.msra.mxu0 0.0
        %1427 = vmatpush.xpose.msra.mxu0 0.0
        %1428 = vmatpush.xpose.msra.mxu0 0.0
        %1429 = vmatpush.xpose.msra.mxu0 0.0
        %1430 = vmatpush.xpose.msra.mxu0 0.0
        %1431 = vmatpush.xpose.msra.mxu0 %v714
        %1432 = vmatpush.xpose.msra.mxu0 %v711
        %1433 = vmatpush.xpose.msra.mxu0 %v708
        %1434 = vmatpush.xpose.msra.mxu0 %v705
        %1435 = vmatmul.f32.gmra.mxu0 %v1309
        %v1436 = vpop.f32.mrf.mxu0
        %v1437 = vadd.f32 %v1408, %v1436
        %1438 = vmatmul.f32.gmra.mxu0 %v1311
        %v1439 = vpop.f32.mrf.mxu0
        %v1440 = vadd.f32 %v1411, %v1439
        %1441 = vmatmul.f32.gmra.mxu0 %v1313
        %v1442 = vpop.f32.mrf.mxu0
        %v1443 = vadd.f32 %v1414, %v1442
        %1444 = vmatmul.f32.gmra.mxu0 %v1315
        %v1445 = vpop.f32.mrf.mxu0
        %v1446 = vadd.f32 %v1417, %v1445
        %1447 = vdwg.mxu0
        %1448 = vmatpush.xpose.msra.mxu0 0.0
        %1449 = vmatpush.xpose.msra.mxu0 0.0
        %1450 = vmatpush.xpose.msra.mxu0 0.0
        %1451 = vmatpush.xpose.msra.mxu0 0.0
        %1452 = vmatpush.xpose.msra.mxu0 0.0
        %1453 = vmatpush.xpose.msra.mxu0 0.0
        %1454 = vmatpush.xpose.msra.mxu0 0.0
        %1455 = vmatpush.xpose.msra.mxu0 0.0
        %1456 = vmatpush.xpose.msra.mxu0 0.0
        %1457 = vmatpush.xpose.msra.mxu0 0.0
        %1458 = vmatpush.xpose.msra.mxu0 0.0
        %1459 = vmatpush.xpose.msra.mxu0 0.0
        %1460 = vmatpush.xpose.msra.mxu0 %v565
        %1461 = vmatpush.xpose.msra.mxu0 %v562
        %1462 = vmatpush.xpose.msra.mxu0 %v559
        %1463 = vmatpush.xpose.msra.mxu0 %v556
        %1464 = vmatmul.f32.gmra.mxu0 %v1316
        %v1465 = vpop.f32.mrf.mxu0
        %v1466 = vadd.f32 0.0, %v1465
        %1467 = vmatmul.f32.gmra.mxu0 %v1318
        %v1468 = vpop.f32.mrf.mxu0
        %v1469 = vadd.f32 0.0, %v1468
        %1470 = vmatmul.f32.gmra.mxu0 %v1320
        %v1471 = vpop.f32.mrf.mxu0
        %v1472 = vadd.f32 0.0, %v1471
        %1473 = vmatmul.f32.gmra.mxu0 %v1322
        %v1474 = vpop.f32.mrf.mxu0
        %v1475 = vadd.f32 0.0, %v1474
        %1476 = vdwg.mxu0
        %1477 = vmatpush.xpose.msra.mxu0 0.0
        %1478 = vmatpush.xpose.msra.mxu0 0.0
        %1479 = vmatpush.xpose.msra.mxu0 0.0
        %1480 = vmatpush.xpose.msra.mxu0 0.0
        %1481 = vmatpush.xpose.msra.mxu0 0.0
        %1482 = vmatpush.xpose.msra.mxu0 0.0
        %1483 = vmatpush.xpose.msra.mxu0 0.0
        %1484 = vmatpush.xpose.msra.mxu0 0.0
        %1485 = vmatpush.xpose.msra.mxu0 0.0
        %1486 = vmatpush.xpose.msra.mxu0 0.0
        %1487 = vmatpush.xpose.msra.mxu0 0.0
        %1488 = vmatpush.xpose.msra.mxu0 0.0
        %1489 = vmatpush.xpose.msra.mxu0 %v726
        %1490 = vmatpush.xpose.msra.mxu0 %v723
        %1491 = vmatpush.xpose.msra.mxu0 %v720
        %1492 = vmatpush.xpose.msra.mxu0 %v717
        %1493 = vmatmul.f32.gmra.mxu0 %v1317
        %v1494 = vpop.f32.mrf.mxu0
        %v1495 = vadd.f32 %v1466, %v1494
        %1496 = vmatmul.f32.gmra.mxu0 %v1319
        %v1497 = vpop.f32.mrf.mxu0
        %v1498 = vadd.f32 %v1469, %v1497
        %1499 = vmatmul.f32.gmra.mxu0 %v1321
        %v1500 = vpop.f32.mrf.mxu0
        %v1501 = vadd.f32 %v1472, %v1500
        %1502 = vmatmul.f32.gmra.mxu0 %v1323
        %v1503 = vpop.f32.mrf.mxu0
        %v1504 = vadd.f32 %v1475, %v1503
        %1505 = vdwg.mxu0
        %1506 = vmatpush.xpose.msra.mxu0 0.0
        %1507 = vmatpush.xpose.msra.mxu0 0.0
        %1508 = vmatpush.xpose.msra.mxu0 0.0
        %1509 = vmatpush.xpose.msra.mxu0 0.0
        %1510 = vmatpush.xpose.msra.mxu0 0.0
        %1511 = vmatpush.xpose.msra.mxu0 0.0
        %1512 = vmatpush.xpose.msra.mxu0 0.0
        %1513 = vmatpush.xpose.msra.mxu0 0.0
        %1514 = vmatpush.xpose.msra.mxu0 0.0
        %1515 = vmatpush.xpose.msra.mxu0 0.0
        %1516 = vmatpush.xpose.msra.mxu0 0.0
        %1517 = vmatpush.xpose.msra.mxu0 0.0
        %1518 = vmatpush.xpose.msra.mxu0 %v577
        %1519 = vmatpush.xpose.msra.mxu0 %v574
        %1520 = vmatpush.xpose.msra.mxu0 %v571
        %1521 = vmatpush.xpose.msra.mxu0 %v568
        %1522 = vmatmul.f32.gmra.mxu0 %v1324
        %v1523 = vpop.f32.mrf.mxu0
        %v1524 = vadd.f32 0.0, %v1523
        %1525 = vmatmul.f32.gmra.mxu0 %v1326
        %v1526 = vpop.f32.mrf.mxu0
        %v1527 = vadd.f32 0.0, %v1526
        %1528 = vmatmul.f32.gmra.mxu0 %v1328
        %v1529 = vpop.f32.mrf.mxu0
        %v1530 = vadd.f32 0.0, %v1529
        %1531 = vmatmul.f32.gmra.mxu0 %v1330
        %v1532 = vpop.f32.mrf.mxu0
        %v1533 = vadd.f32 0.0, %v1532
        %1534 = vdwg.mxu0
        %1535 = vmatpush.xpose.msra.mxu0 0.0
        %1536 = vmatpush.xpose.msra.mxu0 0.0
        %1537 = vmatpush.xpose.msra.mxu0 0.0
        %1538 = vmatpush.xpose.msra.mxu0 0.0
        %1539 = vmatpush.xpose.msra.mxu0 0.0
        %1540 = vmatpush.xpose.msra.mxu0 0.0
        %1541 = vmatpush.xpose.msra.mxu0 0.0
        %1542 = vmatpush.xpose.msra.mxu0 0.0
        %1543 = vmatpush.xpose.msra.mxu0 0.0
        %1544 = vmatpush.xpose.msra.mxu0 0.0
        %1545 = vmatpush.xpose.msra.mxu0 0.0
        %1546 = vmatpush.xpose.msra.mxu0 0.0
        %1547 = vmatpush.xpose.msra.mxu0 %v738
        %1548 = vmatpush.xpose.msra.mxu0 %v735
        %1549 = vmatpush.xpose.msra.mxu0 %v732
        %1550 = vmatpush.xpose.msra.mxu0 %v729
        %1551 = vmatmul.f32.gmra.mxu0 %v1325
        %v1552 = vpop.f32.mrf.mxu0
        %v1553 = vadd.f32 %v1524, %v1552
        %1554 = vmatmul.f32.gmra.mxu0 %v1327
        %v1555 = vpop.f32.mrf.mxu0
        %v1556 = vadd.f32 %v1527, %v1555
        %1557 = vmatmul.f32.gmra.mxu0 %v1329
        %v1558 = vpop.f32.mrf.mxu0
        %v1559 = vadd.f32 %v1530, %v1558
        %1560 = vmatmul.f32.gmra.mxu0 %v1331
        %v1561 = vpop.f32.mrf.mxu0
        %v1562 = vadd.f32 %v1533, %v1561
        %1563 = vdwg.mxu0
        %v1564 = vmul.f32 %v1379, 0.00069053395
        %v1565 = vmul.f32 %v1382, 0.00069053395
        %v1566 = vmul.f32 %v1385, 0.00069053395
        %v1567 = vmul.f32 %v1388, 0.00069053395
        %v1568 = vmul.f32 %v1437, 0.00069053395
        %v1569 = vmul.f32 %v1440, 0.00069053395
        %v1570 = vmul.f32 %v1443, 0.00069053395
        %v1571 = vmul.f32 %v1446, 0.00069053395
        %v1572 = vmul.f32 %v1495, 0.00069053395
        %v1573 = vmul.f32 %v1498, 0.00069053395
        %v1574 = vmul.f32 %v1501, 0.00069053395
        %v1575 = vmul.f32 %v1504, 0.00069053395
        %v1576 = vmul.f32 %v1553, 0.00069053395
        %v1577 = vmul.f32 %v1556, 0.00069053395
        %v1578 = vmul.f32 %v1559, 0.00069053395
        %v1579 = vmul.f32 %v1562, 0.00069053395
        %1580 = vxpose.xlu0.b32.start [1/16] %v1564, 128
        %1581 = vxpose.xlu0.b32.cont [2/16] %v1565, 128
        %1582 = vxpose.xlu0.b32.cont [3/16] %v1566, 128
        %1583 = vxpose.xlu0.b32.cont [4/16] %v1567, 128
        %1584 = vxpose.xlu0.b32.cont [5/16] 0.0, 128
        %1585 = vxpose.xlu0.b32.cont [6/16] 0.0, 128
        %1586 = vxpose.xlu0.b32.cont [7/16] 0.0, 128
        %1587 = vxpose.xlu0.b32.cont [8/16] 0.0, 128
        %1588 = vxpose.xlu0.b32.cont [9/16] 0.0, 128
        %1589 = vxpose.xlu0.b32.cont [10/16] 0.0, 128
        %1590 = vxpose.xlu0.b32.cont [11/16] 0.0, 128
        %1591 = vxpose.xlu0.b32.cont [12/16] 0.0, 128
        %1592 = vxpose.xlu0.b32.cont [13/16] 0.0, 128
        %1593 = vxpose.xlu0.b32.cont [14/16] 0.0, 128
        %1594 = vxpose.xlu0.b32.cont [15/16] 0.0, 128
        %1595 = vxpose.xlu0.b32.end [16/16] 0.0, 128
        %v1596 = vpop.trf.xlu0
        %v1597 = vpop.trf.xlu0
        %v1598 = vpop.trf.xlu0
        %v1599 = vpop.trf.xlu0
        %v1600 = vpop.trf.xlu0
        %v1601 = vpop.trf.xlu0
        %v1602 = vpop.trf.xlu0
        %v1603 = vpop.trf.xlu0
        %v1604 = vpop.trf.xlu0
        %v1605 = vpop.trf.xlu0
        %v1606 = vpop.trf.xlu0
        %v1607 = vpop.trf.xlu0
        %v1608 = vpop.trf.xlu0
        %v1609 = vpop.trf.xlu0
        %v1610 = vpop.trf.xlu0
        %v1611 = vpop.trf.xlu0
        %vm1612 = vcmask 261120
        %v1614 = vsel %vm1612, %v1596, 0
        %v1617 = vsel %vm1612, %v1597, 0
        %v1620 = vsel %vm1612, %v1598, 0
        %v1623 = vsel %vm1612, %v1599, 0
        %1625 = vmatpush.msra.mxu0 0.0
        %1626 = vmatpush.msra.mxu0 0.0
        %1627 = vmatpush.msra.mxu0 0.0
        %1628 = vmatpush.msra.mxu0 0.0
        %1629 = vmatpush.msra.mxu0 0.0
        %1630 = vmatpush.msra.mxu0 0.0
        %1631 = vmatpush.msra.mxu0 0.0
        %1632 = vmatpush.msra.mxu0 0.0
        %1633 = vmatpush.msra.mxu0 0.0
        %1634 = vmatpush.msra.mxu0 0.0
        %1635 = vmatpush.msra.mxu0 0.0
        %1636 = vmatpush.msra.mxu0 0.0
        %1637 = vmatpush.msra.mxu0 %v1018
        %1638 = vmatpush.msra.mxu0 %v1016
        %1639 = vmatpush.msra.mxu0 %v1014
        %1640 = vmatpush.msra.mxu0 %v1012
        %1641 = vmatmul.f32.gmra.mxu0 %v1614
        %v1642 = vpop.f32.mrf.mxu0
        %v1643 = vadd.f32 0.0, %v1642
        %1644 = vmatmul.f32.gmra.mxu0 %v1617
        %v1645 = vpop.f32.mrf.mxu0
        %v1646 = vadd.f32 0.0, %v1645
        %1647 = vmatmul.f32.gmra.mxu0 %v1620
        %v1648 = vpop.f32.mrf.mxu0
        %v1649 = vadd.f32 0.0, %v1648
        %1650 = vmatmul.f32.gmra.mxu0 %v1623
        %v1651 = vpop.f32.mrf.mxu0
        %v1652 = vadd.f32 0.0, %v1651
        %1653 = vdwg.mxu0
        %1654 = vmatpush.msra.mxu0 0.0
        %1655 = vmatpush.msra.mxu0 0.0
        %1656 = vmatpush.msra.mxu0 0.0
        %1657 = vmatpush.msra.mxu0 0.0
        %1658 = vmatpush.msra.mxu0 0.0
        %1659 = vmatpush.msra.mxu0 0.0
        %1660 = vmatpush.msra.mxu0 0.0
        %1661 = vmatpush.msra.mxu0 0.0
        %1662 = vmatpush.msra.mxu0 0.0
        %1663 = vmatpush.msra.mxu0 0.0
        %1664 = vmatpush.msra.mxu0 0.0
        %1665 = vmatpush.msra.mxu0 0.0
        %1666 = vmatpush.msra.mxu0 %v1019
        %1667 = vmatpush.msra.mxu0 %v1017
        %1668 = vmatpush.msra.mxu0 %v1015
        %1669 = vmatpush.msra.mxu0 %v1013
        %1670 = vmatmul.f32.gmra.mxu0 %v1614
        %v1671 = vpop.f32.mrf.mxu0
        %v1672 = vadd.f32 0.0, %v1671
        %1673 = vmatmul.f32.gmra.mxu0 %v1617
        %v1674 = vpop.f32.mrf.mxu0
        %v1675 = vadd.f32 0.0, %v1674
        %1676 = vmatmul.f32.gmra.mxu0 %v1620
        %v1677 = vpop.f32.mrf.mxu0
        %v1678 = vadd.f32 0.0, %v1677
        %1679 = vmatmul.f32.gmra.mxu0 %v1623
        %v1680 = vpop.f32.mrf.mxu0
        %v1681 = vadd.f32 0.0, %v1680
        %1682 = vdwg.mxu0
        %1683 = vxpose.xlu0.b32.start [1/16] %v1568, 128
        %1684 = vxpose.xlu0.b32.cont [2/16] %v1569, 128
        %1685 = vxpose.xlu0.b32.cont [3/16] %v1570, 128
        %1686 = vxpose.xlu0.b32.cont [4/16] %v1571, 128
        %1687 = vxpose.xlu0.b32.cont [5/16] 0.0, 128
        %1688 = vxpose.xlu0.b32.cont [6/16] 0.0, 128
        %1689 = vxpose.xlu0.b32.cont [7/16] 0.0, 128
        %1690 = vxpose.xlu0.b32.cont [8/16] 0.0, 128
        %1691 = vxpose.xlu0.b32.cont [9/16] 0.0, 128
        %1692 = vxpose.xlu0.b32.cont [10/16] 0.0, 128
        %1693 = vxpose.xlu0.b32.cont [11/16] 0.0, 128
        %1694 = vxpose.xlu0.b32.cont [12/16] 0.0, 128
        %1695 = vxpose.xlu0.b32.cont [13/16] 0.0, 128
        %1696 = vxpose.xlu0.b32.cont [14/16] 0.0, 128
        %1697 = vxpose.xlu0.b32.cont [15/16] 0.0, 128
        %1698 = vxpose.xlu0.b32.end [16/16] 0.0, 128
        %v1699 = vpop.trf.xlu0
        %v1700 = vpop.trf.xlu0
        %v1701 = vpop.trf.xlu0
        %v1702 = vpop.trf.xlu0
        %v1703 = vpop.trf.xlu0
        %v1704 = vpop.trf.xlu0
        %v1705 = vpop.trf.xlu0
        %v1706 = vpop.trf.xlu0
        %v1707 = vpop.trf.xlu0
        %v1708 = vpop.trf.xlu0
        %v1709 = vpop.trf.xlu0
        %v1710 = vpop.trf.xlu0
        %v1711 = vpop.trf.xlu0
        %v1712 = vpop.trf.xlu0
        %v1713 = vpop.trf.xlu0
        %v1714 = vpop.trf.xlu0
        %v1716 = vsel %vm1612, %v1699, 0
        %v1719 = vsel %vm1612, %v1700, 0
        %v1722 = vsel %vm1612, %v1701, 0
        %v1725 = vsel %vm1612, %v1702, 0
        %1727 = vmatpush.msra.mxu0 0.0
        %1728 = vmatpush.msra.mxu0 0.0
        %1729 = vmatpush.msra.mxu0 0.0
        %1730 = vmatpush.msra.mxu0 0.0
        %1731 = vmatpush.msra.mxu0 0.0
        %1732 = vmatpush.msra.mxu0 0.0
        %1733 = vmatpush.msra.mxu0 0.0
        %1734 = vmatpush.msra.mxu0 0.0
        %1735 = vmatpush.msra.mxu0 0.0
        %1736 = vmatpush.msra.mxu0 0.0
        %1737 = vmatpush.msra.mxu0 0.0
        %1738 = vmatpush.msra.mxu0 0.0
        %1739 = vmatpush.msra.mxu0 %v1026
        %1740 = vmatpush.msra.mxu0 %v1024
        %1741 = vmatpush.msra.mxu0 %v1022
        %1742 = vmatpush.msra.mxu0 %v1020
        %1743 = vmatmul.f32.gmra.mxu0 %v1716
        %v1744 = vpop.f32.mrf.mxu0
        %v1745 = vadd.f32 0.0, %v1744
        %1746 = vmatmul.f32.gmra.mxu0 %v1719
        %v1747 = vpop.f32.mrf.mxu0
        %v1748 = vadd.f32 0.0, %v1747
        %1749 = vmatmul.f32.gmra.mxu0 %v1722
        %v1750 = vpop.f32.mrf.mxu0
        %v1751 = vadd.f32 0.0, %v1750
        %1752 = vmatmul.f32.gmra.mxu0 %v1725
        %v1753 = vpop.f32.mrf.mxu0
        %v1754 = vadd.f32 0.0, %v1753
        %1755 = vdwg.mxu0
        %1756 = vmatpush.msra.mxu0 0.0
        %1757 = vmatpush.msra.mxu0 0.0
        %1758 = vmatpush.msra.mxu0 0.0
        %1759 = vmatpush.msra.mxu0 0.0
        %1760 = vmatpush.msra.mxu0 0.0
        %1761 = vmatpush.msra.mxu0 0.0
        %1762 = vmatpush.msra.mxu0 0.0
        %1763 = vmatpush.msra.mxu0 0.0
        %1764 = vmatpush.msra.mxu0 0.0
        %1765 = vmatpush.msra.mxu0 0.0
        %1766 = vmatpush.msra.mxu0 0.0
        %1767 = vmatpush.msra.mxu0 0.0
        %1768 = vmatpush.msra.mxu0 %v1027
        %1769 = vmatpush.msra.mxu0 %v1025
        %1770 = vmatpush.msra.mxu0 %v1023
        %1771 = vmatpush.msra.mxu0 %v1021
        %1772 = vmatmul.f32.gmra.mxu0 %v1716
        %v1773 = vpop.f32.mrf.mxu0
        %v1774 = vadd.f32 0.0, %v1773
        %1775 = vmatmul.f32.gmra.mxu0 %v1719
        %v1776 = vpop.f32.mrf.mxu0
        %v1777 = vadd.f32 0.0, %v1776
        %1778 = vmatmul.f32.gmra.mxu0 %v1722
        %v1779 = vpop.f32.mrf.mxu0
        %v1780 = vadd.f32 0.0, %v1779
        %1781 = vmatmul.f32.gmra.mxu0 %v1725
        %v1782 = vpop.f32.mrf.mxu0
        %v1783 = vadd.f32 0.0, %v1782
        %1784 = vdwg.mxu0
        %1785 = vxpose.xlu0.b32.start [1/16] %v1572, 128
        %1786 = vxpose.xlu0.b32.cont [2/16] %v1573, 128
        %1787 = vxpose.xlu0.b32.cont [3/16] %v1574, 128
        %1788 = vxpose.xlu0.b32.cont [4/16] %v1575, 128
        %1789 = vxpose.xlu0.b32.cont [5/16] 0.0, 128
        %1790 = vxpose.xlu0.b32.cont [6/16] 0.0, 128
        %1791 = vxpose.xlu0.b32.cont [7/16] 0.0, 128
        %1792 = vxpose.xlu0.b32.cont [8/16] 0.0, 128
        %1793 = vxpose.xlu0.b32.cont [9/16] 0.0, 128
        %1794 = vxpose.xlu0.b32.cont [10/16] 0.0, 128
        %1795 = vxpose.xlu0.b32.cont [11/16] 0.0, 128
        %1796 = vxpose.xlu0.b32.cont [12/16] 0.0, 128
        %1797 = vxpose.xlu0.b32.cont [13/16] 0.0, 128
        %1798 = vxpose.xlu0.b32.cont [14/16] 0.0, 128
        %1799 = vxpose.xlu0.b32.cont [15/16] 0.0, 128
        %1800 = vxpose.xlu0.b32.end [16/16] 0.0, 128
        %v1801 = vpop.trf.xlu0
        %v1802 = vpop.trf.xlu0
        %v1803 = vpop.trf.xlu0
        %v1804 = vpop.trf.xlu0
        %v1805 = vpop.trf.xlu0
        %v1806 = vpop.trf.xlu0
        %v1807 = vpop.trf.xlu0
        %v1808 = vpop.trf.xlu0
        %v1809 = vpop.trf.xlu0
        %v1810 = vpop.trf.xlu0
        %v1811 = vpop.trf.xlu0
        %v1812 = vpop.trf.xlu0
        %v1813 = vpop.trf.xlu0
        %v1814 = vpop.trf.xlu0
        %v1815 = vpop.trf.xlu0
        %v1816 = vpop.trf.xlu0
        %v1818 = vsel %vm1612, %v1801, 0
        %v1821 = vsel %vm1612, %v1802, 0
        %v1824 = vsel %vm1612, %v1803, 0
        %v1827 = vsel %vm1612, %v1804, 0
        %1829 = vmatpush.msra.mxu0 0.0
        %1830 = vmatpush.msra.mxu0 0.0
        %1831 = vmatpush.msra.mxu0 0.0
        %1832 = vmatpush.msra.mxu0 0.0
        %1833 = vmatpush.msra.mxu0 0.0
        %1834 = vmatpush.msra.mxu0 0.0
        %1835 = vmatpush.msra.mxu0 0.0
        %1836 = vmatpush.msra.mxu0 0.0
        %1837 = vmatpush.msra.mxu0 0.0
        %1838 = vmatpush.msra.mxu0 0.0
        %1839 = vmatpush.msra.mxu0 0.0
        %1840 = vmatpush.msra.mxu0 0.0
        %1841 = vmatpush.msra.mxu0 %v1034
        %1842 = vmatpush.msra.mxu0 %v1032
        %1843 = vmatpush.msra.mxu0 %v1030
        %1844 = vmatpush.msra.mxu0 %v1028
        %1845 = vmatmul.f32.gmra.mxu0 %v1818
        %v1846 = vpop.f32.mrf.mxu0
        %v1847 = vadd.f32 0.0, %v1846
        %1848 = vmatmul.f32.gmra.mxu0 %v1821
        %v1849 = vpop.f32.mrf.mxu0
        %v1850 = vadd.f32 0.0, %v1849
        %1851 = vmatmul.f32.gmra.mxu0 %v1824
        %v1852 = vpop.f32.mrf.mxu0
        %v1853 = vadd.f32 0.0, %v1852
        %1854 = vmatmul.f32.gmra.mxu0 %v1827
        %v1855 = vpop.f32.mrf.mxu0
        %v1856 = vadd.f32 0.0, %v1855
        %1857 = vdwg.mxu0
        %1858 = vmatpush.msra.mxu0 0.0
        %1859 = vmatpush.msra.mxu0 0.0
        %1860 = vmatpush.msra.mxu0 0.0
        %1861 = vmatpush.msra.mxu0 0.0
        %1862 = vmatpush.msra.mxu0 0.0
        %1863 = vmatpush.msra.mxu0 0.0
        %1864 = vmatpush.msra.mxu0 0.0
        %1865 = vmatpush.msra.mxu0 0.0
        %1866 = vmatpush.msra.mxu0 0.0
        %1867 = vmatpush.msra.mxu0 0.0
        %1868 = vmatpush.msra.mxu0 0.0
        %1869 = vmatpush.msra.mxu0 0.0
        %1870 = vmatpush.msra.mxu0 %v1035
        %1871 = vmatpush.msra.mxu0 %v1033
        %1872 = vmatpush.msra.mxu0 %v1031
        %1873 = vmatpush.msra.mxu0 %v1029
        %1874 = vmatmul.f32.gmra.mxu0 %v1818
        %v1875 = vpop.f32.mrf.mxu0
        %v1876 = vadd.f32 0.0, %v1875
        %1877 = vmatmul.f32.gmra.mxu0 %v1821
        %v1878 = vpop.f32.mrf.mxu0
        %v1879 = vadd.f32 0.0, %v1878
        %1880 = vmatmul.f32.gmra.mxu0 %v1824
        %v1881 = vpop.f32.mrf.mxu0
        %v1882 = vadd.f32 0.0, %v1881
        %1883 = vmatmul.f32.gmra.mxu0 %v1827
        %v1884 = vpop.f32.mrf.mxu0
        %v1885 = vadd.f32 0.0, %v1884
        %1886 = vdwg.mxu0
        %1887 = vxpose.xlu0.b32.start [1/16] %v1576, 128
        %1888 = vxpose.xlu0.b32.cont [2/16] %v1577, 128
        %1889 = vxpose.xlu0.b32.cont [3/16] %v1578, 128
        %1890 = vxpose.xlu0.b32.cont [4/16] %v1579, 128
        %1891 = vxpose.xlu0.b32.cont [5/16] 0.0, 128
        %1892 = vxpose.xlu0.b32.cont [6/16] 0.0, 128
        %1893 = vxpose.xlu0.b32.cont [7/16] 0.0, 128
        %1894 = vxpose.xlu0.b32.cont [8/16] 0.0, 128
        %1895 = vxpose.xlu0.b32.cont [9/16] 0.0, 128
        %1896 = vxpose.xlu0.b32.cont [10/16] 0.0, 128
        %1897 = vxpose.xlu0.b32.cont [11/16] 0.0, 128
        %1898 = vxpose.xlu0.b32.cont [12/16] 0.0, 128
        %1899 = vxpose.xlu0.b32.cont [13/16] 0.0, 128
        %1900 = vxpose.xlu0.b32.cont [14/16] 0.0, 128
        %1901 = vxpose.xlu0.b32.cont [15/16] 0.0, 128
        %1902 = vxpose.xlu0.b32.end [16/16] 0.0, 128
        %v1903 = vpop.trf.xlu0
        %v1904 = vpop.trf.xlu0
        %v1905 = vpop.trf.xlu0
        %v1906 = vpop.trf.xlu0
        %v1907 = vpop.trf.xlu0
        %v1908 = vpop.trf.xlu0
        %v1909 = vpop.trf.xlu0
        %v1910 = vpop.trf.xlu0
        %v1911 = vpop.trf.xlu0
        %v1912 = vpop.trf.xlu0
        %v1913 = vpop.trf.xlu0
        %v1914 = vpop.trf.xlu0
        %v1915 = vpop.trf.xlu0
        %v1916 = vpop.trf.xlu0
        %v1917 = vpop.trf.xlu0
        %v1918 = vpop.trf.xlu0
        %v1920 = vsel %vm1612, %v1903, 0
        %v1923 = vsel %vm1612, %v1904, 0
        %v1926 = vsel %vm1612, %v1905, 0
        %v1929 = vsel %vm1612, %v1906, 0
        %1931 = vmatpush.msra.mxu0 0.0
        %1932 = vmatpush.msra.mxu0 0.0
        %1933 = vmatpush.msra.mxu0 0.0
        %1934 = vmatpush.msra.mxu0 0.0
        %1935 = vmatpush.msra.mxu0 0.0
        %1936 = vmatpush.msra.mxu0 0.0
        %1937 = vmatpush.msra.mxu0 0.0
        %1938 = vmatpush.msra.mxu0 0.0
        %1939 = vmatpush.msra.mxu0 0.0
        %1940 = vmatpush.msra.mxu0 0.0
        %1941 = vmatpush.msra.mxu0 0.0
        %1942 = vmatpush.msra.mxu0 0.0
        %1943 = vmatpush.msra.mxu0 %v1042
        %1944 = vmatpush.msra.mxu0 %v1040
        %1945 = vmatpush.msra.mxu0 %v1038
        %1946 = vmatpush.msra.mxu0 %v1036
        %1947 = vmatmul.f32.gmra.mxu0 %v1920
        %v1948 = vpop.f32.mrf.mxu0
        %v1949 = vadd.f32 0.0, %v1948
        %1950 = vmatmul.f32.gmra.mxu0 %v1923
        %v1951 = vpop.f32.mrf.mxu0
        %v1952 = vadd.f32 0.0, %v1951
        %1953 = vmatmul.f32.gmra.mxu0 %v1926
        %v1954 = vpop.f32.mrf.mxu0
        %v1955 = vadd.f32 0.0, %v1954
        %1956 = vmatmul.f32.gmra.mxu0 %v1929
        %v1957 = vpop.f32.mrf.mxu0
        %v1958 = vadd.f32 0.0, %v1957
        %1959 = vdwg.mxu0
        %1960 = vmatpush.msra.mxu0 0.0
        %1961 = vmatpush.msra.mxu0 0.0
        %1962 = vmatpush.msra.mxu0 0.0
        %1963 = vmatpush.msra.mxu0 0.0
        %1964 = vmatpush.msra.mxu0 0.0
        %1965 = vmatpush.msra.mxu0 0.0
        %1966 = vmatpush.msra.mxu0 0.0
        %1967 = vmatpush.msra.mxu0 0.0
        %1968 = vmatpush.msra.mxu0 0.0
        %1969 = vmatpush.msra.mxu0 0.0
        %1970 = vmatpush.msra.mxu0 0.0
        %1971 = vmatpush.msra.mxu0 0.0
        %1972 = vmatpush.msra.mxu0 %v1043
        %1973 = vmatpush.msra.mxu0 %v1041
        %1974 = vmatpush.msra.mxu0 %v1039
        %1975 = vmatpush.msra.mxu0 %v1037
        %1976 = vmatmul.f32.gmra.mxu0 %v1920
        %v1977 = vpop.f32.mrf.mxu0
        %v1978 = vadd.f32 0.0, %v1977
        %1979 = vmatmul.f32.gmra.mxu0 %v1923
        %v1980 = vpop.f32.mrf.mxu0
        %v1981 = vadd.f32 0.0, %v1980
        %1982 = vmatmul.f32.gmra.mxu0 %v1926
        %v1983 = vpop.f32.mrf.mxu0
        %v1984 = vadd.f32 0.0, %v1983
        %1985 = vmatmul.f32.gmra.mxu0 %v1929
        %v1986 = vpop.f32.mrf.mxu0
        %v1987 = vadd.f32 0.0, %v1986
        %1988 = vdwg.mxu0
        %v1989 = vld [vmem:[%s2] sm:$0xff]
        %v1990 = vld [vmem:[%s3] sm:$0xff]
        %1992 = vset.pattern.permute.xlu0 0
        %1993 = vperm.xlu0 %1992, %v1990
        %v1994 = vpop.permute.xlu0 %1993
        %1996 = vmatpush.msra.mxu0 %v1958
        %1997 = vmatpush.msra.mxu0 %v1955
        %1998 = vmatpush.msra.mxu0 %v1952
        %1999 = vmatpush.msra.mxu0 %v1949
        %2000 = vmatpush.msra.mxu0 %v1856
        %2001 = vmatpush.msra.mxu0 %v1853
        %2002 = vmatpush.msra.mxu0 %v1850
        %2003 = vmatpush.msra.mxu0 %v1847
        %2004 = vmatpush.msra.mxu0 %v1754
        %2005 = vmatpush.msra.mxu0 %v1751
        %2006 = vmatpush.msra.mxu0 %v1748
        %2007 = vmatpush.msra.mxu0 %v1745
        %2008 = vmatpush.msra.mxu0 %v1652
        %2009 = vmatpush.msra.mxu0 %v1649
        %2010 = vmatpush.msra.mxu0 %v1646
        %2011 = vmatpush.msra.mxu0 %v1643
        %2012 = vmatmul.f32.gmra.mxu0 %v1989
        %v2013 = vpop.f32.mrf.mxu0
        %v2014 = vadd.f32 %v1994, %v2013
        %2015 = vdwg.mxu0
        %2016 = vmatpush.msra.mxu0 %v1987
        %2017 = vmatpush.msra.mxu0 %v1984
        %2018 = vmatpush.msra.mxu0 %v1981
        %2019 = vmatpush.msra.mxu0 %v1978
        %2020 = vmatpush.msra.mxu0 %v1885
        %2021 = vmatpush.msra.mxu0 %v1882
        %2022 = vmatpush.msra.mxu0 %v1879
        %2023 = vmatpush.msra.mxu0 %v1876
        %2024 = vmatpush.msra.mxu0 %v1783
        %2025 = vmatpush.msra.mxu0 %v1780
        %2026 = vmatpush.msra.mxu0 %v1777
        %2027 = vmatpush.msra.mxu0 %v1774
        %2028 = vmatpush.msra.mxu0 %v1681
        %2029 = vmatpush.msra.mxu0 %v1678
        %2030 = vmatpush.msra.mxu0 %v1675
        %2031 = vmatpush.msra.mxu0 %v1672
        %2032 = vmatmul.f32.gmra.mxu0 %v1989
        %v2033 = vpop.f32.mrf.mxu0
        %v2034 = vadd.f32 %v1994, %v2033
        %2035 = vdwg.mxu0
        %v2036 = vrot.slane %v2014, 4
        %v2037 = vadd.f32 %v2014, %v2036
        %v2038 = vrot.slane %v2037, 2
        %v2039 = vadd.f32 %v2037, %v2038
        %v2040 = vrot.slane %v2039, 1
        %v2041 = vadd.f32 %v2039, %v2040
        %v2042 = vrot.slane %v2034, 4
        %v2043 = vadd.f32 %v2034, %v2042
        %v2044 = vrot.slane %v2043, 2
        %v2045 = vadd.f32 %v2043, %v2044
        %v2046 = vrot.slane %v2045, 1
        %v2047 = vadd.f32 %v2045, %v2046
        %v2048 = vmul.f32 %v2041, 0.125
        %v2049 = vmul.f32 %v2047, 0.125
        %v2050 = vmul.f32 %v2014, %v2014
        %v2051 = vmul.f32 %v2034, %v2034
        %v2052 = vrot.slane %v2050, 4
        %v2053 = vadd.f32 %v2050, %v2052
        %v2054 = vrot.slane %v2053, 2
        %v2055 = vadd.f32 %v2053, %v2054
        %v2056 = vrot.slane %v2055, 1
        %v2057 = vadd.f32 %v2055, %v2056
        %v2058 = vrot.slane %v2051, 4
        %v2059 = vadd.f32 %v2051, %v2058
        %v2060 = vrot.slane %v2059, 2
        %v2061 = vadd.f32 %v2059, %v2060
        %v2062 = vrot.slane %v2061, 1
        %v2063 = vadd.f32 %v2061, %v2062
        %v2064 = vmul.f32 %v2057, 0.125
        %v2065 = vmul.f32 %v2063, 0.125
        %v2066 = vmul.f32 %v2048, %v2048
        %v2067 = vmul.f32 %v2049, %v2049
        %v2068 = vsub.f32 %v2064, %v2066
        %v2069 = vsub.f32 %v2065, %v2067
        %v2070 = vmax.f32 %v2068, 0.0
        %v2071 = vmax.f32 %v2069, 0.0
        %v2072 = vsub.f32 %v2014, %v2048
        %v2073 = vsub.f32 %v2034, %v2049
        %v2074 = vadd.f32 %v2070, 1e-05
        %v2075 = vadd.f32 %v2071, 1e-05
        %v2076 = vrsqrt.pop %v2074
        %v2077 = vmul.f32 %v2076, %v2074
        %v2078 = vmul.f32 %v2077, %v2076
        %v2079 = vmul.f32 0.5, %v2078
        %v2080 = vsub.f32 1.5, %v2079
        %v2081 = vmul.f32 %v2076, %v2080
        %vm2082 = vweird.f32 %v2074
        %vm2083 = vweird.f32 %v2076
        %vm2084 = vmor %vm2082, %vm2083
        %v2085 = vsel %vm2084, %v2076, %v2081
        %v2086 = vrsqrt.pop %v2075
        %v2087 = vmul.f32 %v2086, %v2075
        %v2088 = vmul.f32 %v2087, %v2086
        %v2089 = vmul.f32 0.5, %v2088
        %v2090 = vsub.f32 1.5, %v2089
        %v2091 = vmul.f32 %v2086, %v2090
        %vm2092 = vweird.f32 %v2075
        %vm2093 = vweird.f32 %v2086
        %vm2094 = vmor %vm2092, %vm2093
        %v2095 = vsel %vm2094, %v2086, %v2091
        %v2096 = vmul.f32 %v2072, %v2085
        %v2097 = vmul.f32 %v2073, %v2095
        %v2098 = vld [vmem:[%s4] sm:$0xff]
        %2100 = vset.pattern.permute.xlu0 0
        %2101 = vperm.xlu0 %2100, %v2098
        %v2102 = vpop.permute.xlu0 %2101
        %v2104 = vmul.f32 %v2096, %v2102
        %v2105 = vmul.f32 %v2097, %v2102
        %2106 = vst [vmem:[%s217] sm:$0xff] %v2104
        %2107 = vst [vmem:[%s217 + $0x8] sm:$0xff] %v2105
        %s2108 = sand.u32 %s137, 1
        %s2109 = scalar_lea.sflag [#allocation3], %s2108
        %s2110 = sand.u32 %s137, 1
        %s2111 = smul.addr %s2110, 16
        %s2112 = scalar_lea.vmem [#allocation2], %s2111
        // Predicated region
        $region41: #{tpu_custom_call.1} parent=39 // pred_check
          %p2113 = pneg %p147
        $region42: #{tpu_custom_call.1} parent=39 // pred_check_branch
          %2115 = sbr.rel (%p2113) target = $region44
        $region43: #{tpu_custom_call.1} parent=39 // pred_region
          %2117 = vsyncadd %s2109, 0
          %s2118 = smul.addr %s19, 2
          %s2119 = smul.addr %s2118, 8
          %s2120 = scalar_lea.hbm %s5, %s2119
          %s2122 = sshll.u32 %s2112, 4
          %s2123 = int_to_ptr.vmem [resolvable:$true] %s2122
          %s2124 = sshll.u32 %s2120, 4
          %s2125 = int_to_ptr.hbm [resolvable:$true] %s2124
          %2127 = dma.vmem_to_hbm [thread:$0]  %s2123, 256, %s2125, %s2109
        $region44: #{tpu_custom_call.1} parent=39 // pred_fallthru
          _
      $region40: #{tpu_custom_call.1} parent=5 // pred_fallthru
        _
      %p2128 = scmp.le.s32.totalorder 2, %s14
      // Predicated region
      $region45: #{tpu_custom_call.1} parent=5 // pred_check
        %p2129 = pneg %p2128
      $region46: #{tpu_custom_call.1} parent=5 // pred_check_branch
        %2131 = sbr.rel (%p2129) target = $region48
      $region47: #{tpu_custom_call.1} parent=5 // pred_region
        %s2132 = ssub.s32 %s14, 2
        // Predicated region
        $region49: #{tpu_custom_call.1} parent=47 // pred_check
          %p2133 = pneg %p153
        $region50: #{tpu_custom_call.1} parent=47 // pred_check_branch
          %2135 = sbr.rel (%p2133) target = $region52
        $region51: #{tpu_custom_call.1} parent=47 // pred_region
          %s2136 = sand.u32 %s138, 1
          %s2137 = scalar_lea.sflag [#allocation3], %s2136
          %s2138 = sand.u32 %s138, 1
          %s2139 = smul.addr %s2138, 16
          %s2140 = scalar_lea.vmem [#allocation2], %s2139
          %2142 = dma.done %s2137, 256
        $region52: #{tpu_custom_call.1} parent=47 // pred_fallthru
          _
      $region48: #{tpu_custom_call.1} parent=5 // pred_fallthru
        _
    $region6: #{tpu_custom_call.1} parent=1 // loop_footer
      %s18 = sadd.s32 1, %s14
    $region7: #{tpu_custom_call.1} parent=1 // loop_footer_branch
      %13 = sbr.rel target = $region3
    $region8: #{tpu_custom_call.1} parent=1 // loop_exit
      _
    %2143 = vsyncpa [#allocation3], 1
    %s2144 = scalar_lea.sflag [#allocation3], 1
    %2145 = vsyncpa %s2144, 1

</llo_original>
